<compile_context>
chip_gen: v7x
topology: tpu7x:2x2x1
jax: 0.10.0
libtpu: 0.0.40
codegen_flags: <defaults>
</compile_context>

<pallas_src>
import functools

import jax
import jax.numpy as jnp
from jax.experimental import pallas as pl
from jax.experimental.pallas import tpu as pltpu

LANE = 128


def _round_up(n, m):
    return ((n + m - 1) // m) * m


def mlp_kernel(x_ref, w0_ref, w1_ref, w2_ref, w3_ref, o_ref):
    # One batch tile per grid step; all weights are full VMEM-resident blocks.
    h = x_ref[...].astype(jnp.bfloat16)                     # no-op if x is bf16
    h = jnp.dot(h, w0_ref[...], preferred_element_type=jnp.float32)
    h = jnp.maximum(h, 0.0).astype(jnp.bfloat16)            # relu(fc0)
    h = jnp.dot(h, w1_ref[...], preferred_element_type=jnp.float32)
    h = jnp.maximum(h, 0.0).astype(jnp.bfloat16)            # relu(fc1)
    h = jnp.dot(h, w2_ref[...], preferred_element_type=jnp.float32)
    h = jnp.maximum(h, 0.0).astype(jnp.bfloat16)            # relu(fc2)
    out = jnp.dot(h, w3_ref[...], preferred_element_type=jnp.float32)  # fc3
    o_ref[...] = out.astype(o_ref.dtype)


def prepare_params(w0, w1, w2, w3, param_dtype=jnp.bfloat16):
    """One-time (init-time) weight prep.

    PyTorch [out, in] -> [in, out], cast to bf16, and zero-pad every hidden /
    output dimension up to a multiple of 128 lanes (320->384, 200->256,
    num_classes->128).  Padded weight rows multiply activation columns that are
    ReLU(x @ 0) == 0, so the numerics are bit-identical to the unpadded net.
    """
    num_classes = w3.shape[0]
    in_flat = w0.shape[1]

    h0 = _round_up(w0.shape[0], LANE)          # 320 -> 384
    h1 = _round_up(w1.shape[0], LANE)          # 320 -> 384
    h2 = _round_up(w2.shape[0], LANE)          # 200 -> 256
    nc_pad = _round_up(num_classes, LANE)      # 10  -> 128

    def pad_t(w, rows, cols):
        out = jnp.zeros((rows, cols), param_dtype)
        return out.at[: w.shape[1], : w.shape[0]].set(w.T.astype(param_dtype))

    params = (
        pad_t(w0, in_flat, h0),   # [784, 384]
        pad_t(w1, h0, h1),        # [384, 384]
        pad_t(w2, h1, h2),        # [384, 256]
        pad_t(w3, h2, nc_pad),    # [256, 128]
    )
    return params, num_classes


@functools.partial(jax.jit, static_argnames=("num_classes", "batch_tile"))
def simple_net_forward(x, params, *, num_classes, batch_tile=512):
    """x: [B, 1, 28, 28] (anything flattening to [B, 784]); bf16 or f32 accepted.
    params: output of prepare_params (bf16, [in,out], lane-padded dims)."""
    w0t, w1t, w2t, w3t = params
    in_flat = w0t.shape[0]
    nc_pad = w3t.shape[1]

    x2d = x.reshape(-1, in_flat)               # == x.view(-1, 784); keep dtype
    B = x2d.shape[0]

    # --- batch tile selection -------------------------------------------------
    # Small B: one sublane-aligned tile.  Large B: big tiles (default 512) but
    # always >= 2 grid steps so both v7x TensorCores get work.
    B8 = _round_up(B, 8)
    if B8 <= batch_tile:
        tb = B8
    else:
        half = _round_up(-(-B // 2), 256)      # ~B/2 rounded up to 256
        tb = max(256, min(batch_tile, half))
    grid = (pl.cdiv(B, tb),)

    const_spec = lambda shape: pl.BlockSpec(shape, lambda i: (0, 0))

    # --- scoped-VMEM estimate (only matters if batch_tile is raised a lot) ----
    out_itemsize = jnp.dtype(jnp.float32).itemsize
    weight_bytes = sum(w.size * w.dtype.itemsize for w in (w0t, w1t, w2t, w3t))
    vmem_est = (2 * tb * in_flat * x2d.dtype.itemsize      # double-buffered input
                + 2 * tb * nc_pad * out_itemsize           # double-buffered output
                + 2 * weight_bytes)                        # weight blocks
    vmem_limit = None
    if vmem_est > 16 * 2**20:                              # v5e scoped default
        vmem_limit = min(int(vmem_est * 1.25), 64 * 2**20)

    flops = 2 * B * (w0t.shape[0] * w0t.shape[1]
                     + w1t.shape[0] * w1t.shape[1]
                     + w2t.shape[0] * w2t.shape[1]
                     + w3t.shape[0] * w3t.shape[1])
    bytes_accessed = (weight_bytes
                      + x2d.size * x2d.dtype.itemsize
                      + B * nc_pad * out_itemsize)

    out_padded = pl.pallas_call(
        mlp_kernel,
        out_shape=jax.ShapeDtypeStruct((B, nc_pad), jnp.float32),
        grid=grid,
        in_specs=[
            pl.BlockSpec((tb, in_flat), lambda i: (i, 0)),   # batch-tiled input
            const_spec(w0t.shape),                           # weights: resident
            const_spec(w1t.shape),
            const_spec(w2t.shape),
            const_spec(w3t.shape),
        ],
        out_specs=pl.BlockSpec((tb, nc_pad), lambda i: (i, 0)),
        compiler_params=pltpu.CompilerParams(
            dimension_semantics=("parallel",),
            vmem_limit_bytes=vmem_limit),
        cost_estimate=pl.CostEstimate(flops=flops, transcendentals=0,
                                      bytes_accessed=bytes_accessed),
    )(x2d, w0t, w1t, w2t, w3t)

    return out_padded[:, :num_classes]


def reference_forward(x, w0, w1, w2, w3, param_dtype=jnp.bfloat16):
    """Pure-JAX reference replicating the kernel's bf16 quantization points."""
    q = lambda a: a.astype(param_dtype).astype(jnp.float32)
    h = q(x.reshape(-1, w0.shape[1]))
    h = q(jnp.maximum(h @ q(w0).T, 0.0))
    h = q(jnp.maximum(h @ q(w1).T, 0.0))
    h = q(jnp.maximum(h @ q(w2).T, 0.0))
    return h @ q(w3).T


if __name__ == "__main__":
    num_classes = 10
    input_shape = (28, 28)
    in_flat = input_shape[0] * input_shape[1]      # 784
    B = 8

    key = jax.random.PRNGKey(0)
    kx, k0, k1, k2, k3 = jax.random.split(key, 5)

    # PyTorch Linear convention: [out_features, in_features], no bias.
    def init_w(k, out_f, in_f):
        bound = 1.0 / jnp.sqrt(in_f)
        return jax.random.uniform(k, (out_f, in_f), jnp.float32, -bound, bound)

    w0 = init_w(k0, 320, in_flat)
    w1 = init_w(k1, 320, 320)
    w2 = init_w(k2, 200, 320)
    w3 = init_w(k3, num_classes, 200)

    x = jax.random.normal(kx, (B, 1, *input_shape), jnp.float32)

    # One-time weight prep (transpose + bf16 cast + lane-pad hidden/output dims).
    params, nc = prepare_params(w0, w1, w2, w3)

    out = simple_net_forward(x, params, num_classes=nc)
    out = jax.block_until_ready(out)

    ref = reference_forward(x, w0, w1, w2, w3)
    assert out.shape == (B, num_classes)
    assert jnp.allclose(out, ref, atol=5e-3, rtol=5e-3), "mismatch vs reference"

    print("KERNEL_OK")
</pallas_src>

<mosaic_0001>
module attributes {stable_mosaic.version = 11 : i64} {
  func.func @mlp_kernel(%arg0: i32, %arg1: memref<8x784xf32, #tpu.memory_space<vmem>>, %arg2: memref<784x384xbf16, #tpu.memory_space<vmem>>, %arg3: memref<384x384xbf16, #tpu.memory_space<vmem>>, %arg4: memref<384x256xbf16, #tpu.memory_space<vmem>>, %arg5: memref<256x128xbf16, #tpu.memory_space<vmem>>, %arg6: memref<8x128xf32, #tpu.memory_space<vmem>>) attributes {dimension_semantics = [#tpu.dimension_semantics<parallel>], iteration_bounds = array<i64: 1>, scalar_prefetch = 0 : i64, scratch_operands = 0 : i64, tpu.core_type = #tpu.core_type<tc>, window_params = [{transform_indices = @transform_0, window_bounds = array<i64: 8, 784>}, {pipeline_mode = #tpu.pipeline_mode<synchronous>, transform_indices = @transform_1, window_bounds = array<i64: 784, 384>}, {pipeline_mode = #tpu.pipeline_mode<synchronous>, transform_indices = @transform_2, window_bounds = array<i64: 384, 384>}, {pipeline_mode = #tpu.pipeline_mode<synchronous>, transform_indices = @transform_3, window_bounds = array<i64: 384, 256>}, {pipeline_mode = #tpu.pipeline_mode<synchronous>, transform_indices = @transform_4, window_bounds = array<i64: 256, 128>}, {transform_indices = @transform_5, window_bounds = array<i64: 8, 128>}]} {
    %c0 = arith.constant 0 : index
    %c0_0 = arith.constant 0 : index
    %0 = vector.load %arg1[%c0, %c0_0] : memref<8x784xf32, #tpu.memory_space<vmem>>, vector<8x784xf32>
    %1 = arith.truncf %0 : vector<8x784xf32> to vector<8x784xbf16>
    %c0_1 = arith.constant 0 : index
    %c0_2 = arith.constant 0 : index
    %2 = vector.load %arg2[%c0_1, %c0_2] : memref<784x384xbf16, #tpu.memory_space<vmem>>, vector<784x384xbf16>
    %cst = arith.constant dense<0.000000e+00> : vector<8x384xf32>
    %3 = tpu.matmul %1, %2, %cst {dimension_numbers = #tpu.dot_dimension_numbers<[1], [0], [0], [1], [0, 0, 1, 1], [], []>} : vector<8x784xbf16>, vector<784x384xbf16>, vector<8x384xf32> -> vector<8x384xf32>
    %cst_3 = arith.constant 0.000000e+00 : f32
    %4 = vector.broadcast %cst_3 : f32 to vector<8x384xf32>
    %5 = arith.maximumf %3, %4 : vector<8x384xf32>
    %6 = arith.truncf %5 : vector<8x384xf32> to vector<8x384xbf16>
    %c0_4 = arith.constant 0 : index
    %c0_5 = arith.constant 0 : index
    %7 = vector.load %arg3[%c0_4, %c0_5] : memref<384x384xbf16, #tpu.memory_space<vmem>>, vector<384x384xbf16>
    %cst_6 = arith.constant dense<0.000000e+00> : vector<8x384xf32>
    %8 = tpu.matmul %6, %7, %cst_6 {dimension_numbers = #tpu.dot_dimension_numbers<[1], [0], [0], [1], [0, 0, 1, 1], [], []>} : vector<8x384xbf16>, vector<384x384xbf16>, vector<8x384xf32> -> vector<8x384xf32>
    %cst_7 = arith.constant 0.000000e+00 : f32
    %9 = vector.broadcast %cst_7 : f32 to vector<8x384xf32>
    %10 = arith.maximumf %8, %9 : vector<8x384xf32>
    %11 = arith.truncf %10 : vector<8x384xf32> to vector<8x384xbf16>
    %c0_8 = arith.constant 0 : index
    %c0_9 = arith.constant 0 : index
    %12 = vector.load %arg4[%c0_8, %c0_9] : memref<384x256xbf16, #tpu.memory_space<vmem>>, vector<384x256xbf16>
    %cst_10 = arith.constant dense<0.000000e+00> : vector<8x256xf32>
    %13 = tpu.matmul %11, %12, %cst_10 {dimension_numbers = #tpu.dot_dimension_numbers<[1], [0], [0], [1], [0, 0, 1, 1], [], []>} : vector<8x384xbf16>, vector<384x256xbf16>, vector<8x256xf32> -> vector<8x256xf32>
    %cst_11 = arith.constant 0.000000e+00 : f32
    %14 = vector.broadcast %cst_11 : f32 to vector<8x256xf32>
    %15 = arith.maximumf %13, %14 : vector<8x256xf32>
    %16 = arith.truncf %15 : vector<8x256xf32> to vector<8x256xbf16>
    %c0_12 = arith.constant 0 : index
    %c0_13 = arith.constant 0 : index
    %17 = vector.load %arg5[%c0_12, %c0_13] : memref<256x128xbf16, #tpu.memory_space<vmem>>, vector<256x128xbf16>
    %cst_14 = arith.constant dense<0.000000e+00> : vector<8x128xf32>
    %18 = tpu.matmul %16, %17, %cst_14 {dimension_numbers = #tpu.dot_dimension_numbers<[1], [0], [0], [1], [0, 0, 1, 1], [], []>} : vector<8x256xbf16>, vector<256x128xbf16>, vector<8x128xf32> -> vector<8x128xf32>
    %c0_15 = arith.constant 0 : index
    %c0_16 = arith.constant 0 : index
    %19 = vector.load %arg6[%c0_15, %c0_16] : memref<8x128xf32, #tpu.memory_space<vmem>>, vector<8x128xf32>
    tpu.vector_store %arg6[%c0_15, %c0_16], %18 {strides = array<i32>} : memref<8x128xf32, #tpu.memory_space<vmem>>, vector<8x128xf32>,
    return
  }
  func.func @transform_0(%arg0: i32) -> (i32, i32) {
    %c0_i32 = arith.constant 0 : i32
    %c0_i32_0 = arith.constant 0 : i32
    return %arg0, %c0_i32 : i32, i32
  }
  func.func @transform_1(%arg0: i32) -> (i32, i32) {
    %c0_i32 = arith.constant 0 : i32
    %c0_i32_0 = arith.constant 0 : i32
    %c0_i32_1 = arith.constant 0 : i32
    return %c0_i32, %c0_i32_0 : i32, i32
  }
  func.func @transform_2(%arg0: i32) -> (i32, i32) {
    %c0_i32 = arith.constant 0 : i32
    %c0_i32_0 = arith.constant 0 : i32
    %c0_i32_1 = arith.constant 0 : i32
    return %c0_i32, %c0_i32_0 : i32, i32
  }
  func.func @transform_3(%arg0: i32) -> (i32, i32) {
    %c0_i32 = arith.constant 0 : i32
    %c0_i32_0 = arith.constant 0 : i32
    %c0_i32_1 = arith.constant 0 : i32
    return %c0_i32, %c0_i32_0 : i32, i32
  }
  func.func @transform_4(%arg0: i32) -> (i32, i32) {
    %c0_i32 = arith.constant 0 : i32
    %c0_i32_0 = arith.constant 0 : i32
    %c0_i32_1 = arith.constant 0 : i32
    return %c0_i32, %c0_i32_0 : i32, i32
  }
  func.func @transform_5(%arg0: i32) -> (i32, i32) {
    %c0_i32 = arith.constant 0 : i32
    %c0_i32_0 = arith.constant 0 : i32
    return %arg0, %c0_i32 : i32, i32
  }
}

</mosaic_0001>

<llo_original>
// kernel: simple_net_forward.1
$region0: #{simple_net_forward.1}
  #allocation0 [shape = 'u32[]', space=smem, size = 0x4, offset = 0x4, fixed_abs, tag = 'smem constant byte address 0x4 - core index']
  #allocation1 [shape = 'u32[144,128]{1,0:T(1,128)}', space=vmem, size = 0x12000, scoped, tag = 'internal scratch']
  %s0 = inlined_call_operand.vmem [shape: f32[8,784], index: 0, kind: input, shape index: {}]
  %s1 = inlined_call_operand.hbm [shape: bf16[784,384], index: 1, kind: input, shape index: {}]
  %s2 = inlined_call_operand.vmem [shape: bf16[384,384], index: 2, kind: input, shape index: {}]
  %s3 = inlined_call_operand.hbm [shape: bf16[384,256], index: 3, kind: input, shape index: {}]
  %s4 = inlined_call_operand.vmem [shape: bf16[256,128], index: 4, kind: input, shape index: {}]
  %s5 = inlined_call_operand.hbm [shape: f32[8,128], index: 5, kind: output, shape index: {}]
  %s6 = sld [smem:[#allocation0]]
  $region38: #{simple_net_forward.1} parent=0
    _
  %s8 = ssub.s32 1, %s6
  %s9 = scalar_select 0, %s8, %s6
  $region1: #{simple_net_forward.1} parent=0
    #allocation2 [shape = 'u8[602112]{0}', space=vmem, size = 0x93000, scoped, tag = 'input window, operand 1, single buffered']
    #allocation3 [shape = 's32[1]{0}', space=sflag, size = 0x4, scoped, tag = 'scoped memory for simple_net_forward.1']
    #allocation4 [shape = 's32[1]{0}', space=sflag, size = 0x4, scoped, tag = 'scoped memory for simple_net_forward.1']
    #allocation5 [shape = 'u8[196608]{0}', space=vmem, size = 0x30000, scoped, tag = 'input window, operand 3, single buffered']
    #allocation6 [shape = 's32[1]{0}', space=sflag, size = 0x4, scoped, tag = 'scoped memory for simple_net_forward.1']
    #allocation7 [shape = 'u8[4096]{0}', space=vmem, size = 0x1000, scoped, tag = 'output window, operand 0, single buffered']
    %10 = vsyncpa [#allocation3], 0
    %11 = vsyncpa [#allocation6], 0
    %12 = vsyncpa [#allocation4], 0
    // Predicated region
    $region2: #{simple_net_forward.1} parent=1 // pred_check
      _
    $region3: #{simple_net_forward.1} parent=1 // pred_check_branch
      %14 = sbr.rel (0) target = $region5
    $region4: #{simple_net_forward.1} parent=1 // pred_region
      _
    $region5: #{simple_net_forward.1} parent=1 // pred_fallthru
      _
    // Predicated region
    $region6: #{simple_net_forward.1} parent=1 // pred_check
      _
    $region7: #{simple_net_forward.1} parent=1 // pred_check_branch
      %16 = sbr.rel (0) target = $region9
    $region8: #{simple_net_forward.1} parent=1 // pred_region
      %s18 = ssub.s32 18816, 18816
      %19 = vsyncadd [#allocation3], %s18
      %s20 = sshll.u32 [#allocation2], 4
      %s21 = int_to_ptr.vmem [resolvable:$true] %s20
      %26 = dma.hbm_to_vmem [thread:$0]  %s1, 18816, %s21, [#allocation3], 192, 192, 12
    $region9: #{simple_net_forward.1} parent=1 // pred_fallthru
      _
    // Predicated region
    $region10: #{simple_net_forward.1} parent=1 // pred_check
      _
    $region11: #{simple_net_forward.1} parent=1 // pred_check_branch
      %28 = sbr.rel (0) target = $region13
    $region12: #{simple_net_forward.1} parent=1 // pred_region
      _
    $region13: #{simple_net_forward.1} parent=1 // pred_fallthru
      _
    // Predicated region
    $region14: #{simple_net_forward.1} parent=1 // pred_check
      _
    $region15: #{simple_net_forward.1} parent=1 // pred_check_branch
      %30 = sbr.rel (0) target = $region17
    $region16: #{simple_net_forward.1} parent=1 // pred_region
      %s32 = ssub.s32 6144, 6144
      %33 = vsyncadd [#allocation6], %s32
      %s34 = sshll.u32 [#allocation5], 4
      %s35 = int_to_ptr.vmem [resolvable:$true] %s34
      %40 = dma.hbm_to_vmem [thread:$0]  %s3, 6144, %s35, [#allocation6], 128, 128, 8
    $region17: #{simple_net_forward.1} parent=1 // pred_fallthru
      _
    // Predicated region
    $region18: #{simple_net_forward.1} parent=1 // pred_check
      _
    $region19: #{simple_net_forward.1} parent=1 // pred_check_branch
      %42 = sbr.rel (0) target = $region21
    $region20: #{simple_net_forward.1} parent=1 // pred_region
      _
    $region21: #{simple_net_forward.1} parent=1 // pred_fallthru
      _
    // Predicated region
    $region22: #{simple_net_forward.1} parent=1 // pred_check
      _
    $region23: #{simple_net_forward.1} parent=1 // pred_check_branch
      %44 = sbr.rel (0) target = $region25
    $region24: #{simple_net_forward.1} parent=1 // pred_region
      %45 = dma.done [#allocation3], 18816
    $region25: #{simple_net_forward.1} parent=1 // pred_fallthru
      _
    // Predicated region
    $region26: #{simple_net_forward.1} parent=1 // pred_check
      _
    $region27: #{simple_net_forward.1} parent=1 // pred_check_branch
      %47 = sbr.rel (0) target = $region29
    $region28: #{simple_net_forward.1} parent=1 // pred_region
      %48 = dma.done [#allocation6], 6144
    $region29: #{simple_net_forward.1} parent=1 // pred_fallthru
      _
    %v50 = vld [vmem:[%s0] sm:$0xff]
    %v51 = vld [vmem:[%s0 + $0x8] sm:$0xff]
    %v52 = vld [vmem:[%s0 + $0x10] sm:$0xff]
    %v53 = vld [vmem:[%s0 + $0x18] sm:$0xff]
    %v54 = vld [vmem:[%s0 + $0x20] sm:$0xff]
    %v55 = vld [vmem:[%s0 + $0x28] sm:$0xff]
    %v56 = vld [vmem:[%s0 + $0x30] sm:$0xff]
    %v57 = vpack.c.bf16 %v50, %v50
    %v58 = vpack.c.bf16 %v51, %v51
    %v59 = vpack.c.bf16 %v52, %v52
    %v60 = vpack.c.bf16 %v53, %v53
    %v61 = vpack.c.bf16 %v54, %v54
    %v62 = vpack.c.bf16 %v55, %v55
    %v63 = vpack.c.bf16 %v56, %v56
    %v64 = vld [vmem:[#allocation2] sm:$0xff]
    %v65 = vld [vmem:[#allocation2 + $0x8] sm:$0xf]
    %v66 = vld [vmem:[#allocation2 + $0xc] sm:$0xff]
    %v67 = vld [vmem:[#allocation2 + $0x14] sm:$0xf]
    %v68 = vld [vmem:[#allocation2 + $0x18] sm:$0xff]
    %v69 = vld [vmem:[#allocation2 + $0x20] sm:$0xf]
    %v70 = vld [vmem:[#allocation2 + $0x24] sm:$0xff]
    %v71 = vld [vmem:[#allocation2 + $0x2c] sm:$0xf]
    %v72 = vld [vmem:[#allocation2 + $0x30] sm:$0xff]
    %v73 = vld [vmem:[#allocation2 + $0x38] sm:$0xf]
    %v74 = vld [vmem:[#allocation2 + $0x3c] sm:$0xff]
    %v75 = vld [vmem:[#allocation2 + $0x44] sm:$0xf]
    %v76 = vld [vmem:[#allocation2 + $0x48] sm:$0xff]
    %v77 = vld [vmem:[#allocation2 + $0x50] sm:$0xf]
    %v78 = vld [vmem:[#allocation2 + $0x54] sm:$0xff]
    %v79 = vld [vmem:[#allocation2 + $0x5c] sm:$0xf]
    %v80 = vld [vmem:[#allocation2 + $0x60] sm:$0xff]
    %v81 = vld [vmem:[#allocation2 + $0x68] sm:$0xf]
    %v82 = vld [vmem:[#allocation2 + $0x6c] sm:$0xff]
    %v83 = vld [vmem:[#allocation2 + $0x74] sm:$0xf]
    %v84 = vld [vmem:[#allocation2 + $0x78] sm:$0xff]
    %v85 = vld [vmem:[#allocation2 + $0x80] sm:$0xf]
    %v86 = vld [vmem:[#allocation2 + $0x84] sm:$0xff]
    %v87 = vld [vmem:[#allocation2 + $0x8c] sm:$0xf]
    %v88 = vld [vmem:[#allocation2 + $0x90] sm:$0xff]
    %v89 = vld [vmem:[#allocation2 + $0x98] sm:$0xf]
    %v90 = vld [vmem:[#allocation2 + $0x9c] sm:$0xff]
    %v91 = vld [vmem:[#allocation2 + $0xa4] sm:$0xf]
    %v92 = vld [vmem:[#allocation2 + $0xa8] sm:$0xff]
    %v93 = vld [vmem:[#allocation2 + $0xb0] sm:$0xf]
    %v94 = vld [vmem:[#allocation2 + $0xb4] sm:$0xff]
    %v95 = vld [vmem:[#allocation2 + $0xbc] sm:$0xf]
    %v96 = vld [vmem:[#allocation2 + $0xc0] sm:$0xff]
    %v97 = vld [vmem:[#allocation2 + $0xc8] sm:$0xf]
    %v98 = vld [vmem:[#allocation2 + $0xcc] sm:$0xff]
    %v99 = vld [vmem:[#allocation2 + $0xd4] sm:$0xf]
    %v100 = vld [vmem:[#allocation2 + $0xd8] sm:$0xff]
    %v101 = vld [vmem:[#allocation2 + $0xe0] sm:$0xf]
    %v102 = vld [vmem:[#allocation2 + $0xe4] sm:$0xff]
    %v103 = vld [vmem:[#allocation2 + $0xec] sm:$0xf]
    %v104 = vld [vmem:[#allocation2 + $0xf0] sm:$0xff]
    %v105 = vld [vmem:[#allocation2 + $0xf8] sm:$0xf]
    %v106 = vld [vmem:[#allocation2 + $0xfc] sm:$0xff]
    %v107 = vld [vmem:[#allocation2 + $0x104] sm:$0xf]
    %v108 = vld [vmem:[#allocation2 + $0x108] sm:$0xff]
    %v109 = vld [vmem:[#allocation2 + $0x110] sm:$0xf]
    %v110 = vld [vmem:[#allocation2 + $0x114] sm:$0xff]
    %v111 = vld [vmem:[#allocation2 + $0x11c] sm:$0xf]
    %v112 = vld [vmem:[#allocation2 + $0x120] sm:$0xff]
    %v113 = vld [vmem:[#allocation2 + $0x128] sm:$0xf]
    %v114 = vld [vmem:[#allocation2 + $0x12c] sm:$0xff]
    %v115 = vld [vmem:[#allocation2 + $0x134] sm:$0xf]
    %v116 = vld [vmem:[#allocation2 + $0x138] sm:$0xff]
    %v117 = vld [vmem:[#allocation2 + $0x140] sm:$0xf]
    %v118 = vld [vmem:[#allocation2 + $0x144] sm:$0xff]
    %v119 = vld [vmem:[#allocation2 + $0x14c] sm:$0xf]
    %v120 = vld [vmem:[#allocation2 + $0x150] sm:$0xff]
    %v121 = vld [vmem:[#allocation2 + $0x158] sm:$0xf]
    %v122 = vld [vmem:[#allocation2 + $0x15c] sm:$0xff]
    %v123 = vld [vmem:[#allocation2 + $0x164] sm:$0xf]
    %v124 = vld [vmem:[#allocation2 + $0x168] sm:$0xff]
    %v125 = vld [vmem:[#allocation2 + $0x170] sm:$0xf]
    %v126 = vld [vmem:[#allocation2 + $0x174] sm:$0xff]
    %v127 = vld [vmem:[#allocation2 + $0x17c] sm:$0xf]
    %v128 = vld [vmem:[#allocation2 + $0x180] sm:$0xff]
    %v129 = vld [vmem:[#allocation2 + $0x188] sm:$0xf]
    %v130 = vld [vmem:[#allocation2 + $0x18c] sm:$0xff]
    %v131 = vld [vmem:[#allocation2 + $0x194] sm:$0xf]
    %v132 = vld [vmem:[#allocation2 + $0x198] sm:$0xff]
    %v133 = vld [vmem:[#allocation2 + $0x1a0] sm:$0xf]
    %v134 = vld [vmem:[#allocation2 + $0x1a4] sm:$0xff]
    %v135 = vld [vmem:[#allocation2 + $0x1ac] sm:$0xf]
    %v136 = vld [vmem:[#allocation2 + $0x1b0] sm:$0xff]
    %v137 = vld [vmem:[#allocation2 + $0x1b8] sm:$0xf]
    %v138 = vld [vmem:[#allocation2 + $0x1bc] sm:$0xff]
    %v139 = vld [vmem:[#allocation2 + $0x1c4] sm:$0xf]
    %v140 = vld [vmem:[#allocation2 + $0x1c8] sm:$0xff]
    %v141 = vld [vmem:[#allocation2 + $0x1d0] sm:$0xf]
    %v142 = vld [vmem:[#allocation2 + $0x1d4] sm:$0xff]
    %v143 = vld [vmem:[#allocation2 + $0x1dc] sm:$0xf]
    %v144 = vld [vmem:[#allocation2 + $0x1e0] sm:$0xff]
    %v145 = vld [vmem:[#allocation2 + $0x1e8] sm:$0xf]
    %v146 = vld [vmem:[#allocation2 + $0x1ec] sm:$0xff]
    %v147 = vld [vmem:[#allocation2 + $0x1f4] sm:$0xf]
    %v148 = vld [vmem:[#allocation2 + $0x1f8] sm:$0xff]
    %v149 = vld [vmem:[#allocation2 + $0x200] sm:$0xf]
    %v150 = vld [vmem:[#allocation2 + $0x204] sm:$0xff]
    %v151 = vld [vmem:[#allocation2 + $0x20c] sm:$0xf]
    %v152 = vld [vmem:[#allocation2 + $0x210] sm:$0xff]
    %v153 = vld [vmem:[#allocation2 + $0x218] sm:$0xf]
    %v154 = vld [vmem:[#allocation2 + $0x21c] sm:$0xff]
    %v155 = vld [vmem:[#allocation2 + $0x224] sm:$0xf]
    %v156 = vld [vmem:[#allocation2 + $0x228] sm:$0xff]
    %v157 = vld [vmem:[#allocation2 + $0x230] sm:$0xf]
    %v158 = vld [vmem:[#allocation2 + $0x234] sm:$0xff]
    %v159 = vld [vmem:[#allocation2 + $0x23c] sm:$0xf]
    %v160 = vld [vmem:[#allocation2 + $0x240] sm:$0xff]
    %v161 = vld [vmem:[#allocation2 + $0x248] sm:$0xf]
    %v162 = vld [vmem:[#allocation2 + $0x24c] sm:$0xff]
    %v163 = vld [vmem:[#allocation2 + $0x254] sm:$0xf]
    %v164 = vld [vmem:[#allocation2 + $0x258] sm:$0xff]
    %v165 = vld [vmem:[#allocation2 + $0x260] sm:$0xf]
    %v166 = vld [vmem:[#allocation2 + $0x264] sm:$0xff]
    %v167 = vld [vmem:[#allocation2 + $0x26c] sm:$0xf]
    %v168 = vld [vmem:[#allocation2 + $0x270] sm:$0xff]
    %v169 = vld [vmem:[#allocation2 + $0x278] sm:$0xf]
    %v170 = vld [vmem:[#allocation2 + $0x27c] sm:$0xff]
    %v171 = vld [vmem:[#allocation2 + $0x284] sm:$0xf]
    %v172 = vld [vmem:[#allocation2 + $0x288] sm:$0xff]
    %v173 = vld [vmem:[#allocation2 + $0x290] sm:$0xf]
    %v174 = vld [vmem:[#allocation2 + $0x294] sm:$0xff]
    %v175 = vld [vmem:[#allocation2 + $0x29c] sm:$0xf]
    %v176 = vld [vmem:[#allocation2 + $0x2a0] sm:$0xff]
    %v177 = vld [vmem:[#allocation2 + $0x2a8] sm:$0xf]
    %v178 = vld [vmem:[#allocation2 + $0x2ac] sm:$0xff]
    %v179 = vld [vmem:[#allocation2 + $0x2b4] sm:$0xf]
    %v180 = vld [vmem:[#allocation2 + $0x2b8] sm:$0xff]
    %v181 = vld [vmem:[#allocation2 + $0x2c0] sm:$0xf]
    %v182 = vld [vmem:[#allocation2 + $0x2c4] sm:$0xff]
    %v183 = vld [vmem:[#allocation2 + $0x2cc] sm:$0xf]
    %v184 = vld [vmem:[#allocation2 + $0x2d0] sm:$0xff]
    %v185 = vld [vmem:[#allocation2 + $0x2d8] sm:$0xf]
    %v186 = vld [vmem:[#allocation2 + $0x2dc] sm:$0xff]
    %v187 = vld [vmem:[#allocation2 + $0x2e4] sm:$0xf]
    %v188 = vld [vmem:[#allocation2 + $0x2e8] sm:$0xff]
    %v189 = vld [vmem:[#allocation2 + $0x2f0] sm:$0xf]
    %v190 = vld [vmem:[#allocation2 + $0x2f4] sm:$0xff]
    %v191 = vld [vmem:[#allocation2 + $0x2fc] sm:$0xf]
    %v192 = vld [vmem:[#allocation2 + $0x300] sm:$0xff]
    %v193 = vld [vmem:[#allocation2 + $0x308] sm:$0xf]
    %v194 = vld [vmem:[#allocation2 + $0x30c] sm:$0xff]
    %v195 = vld [vmem:[#allocation2 + $0x314] sm:$0xf]
    %v196 = vld [vmem:[#allocation2 + $0x318] sm:$0xff]
    %v197 = vld [vmem:[#allocation2 + $0x320] sm:$0xf]
    %v198 = vld [vmem:[#allocation2 + $0x324] sm:$0xff]
    %v199 = vld [vmem:[#allocation2 + $0x32c] sm:$0xf]
    %v200 = vld [vmem:[#allocation2 + $0x330] sm:$0xff]
    %v201 = vld [vmem:[#allocation2 + $0x338] sm:$0xf]
    %v202 = vld [vmem:[#allocation2 + $0x33c] sm:$0xff]
    %v203 = vld [vmem:[#allocation2 + $0x344] sm:$0xf]
    %v204 = vld [vmem:[#allocation2 + $0x348] sm:$0xff]
    %v205 = vld [vmem:[#allocation2 + $0x350] sm:$0xf]
    %v206 = vld [vmem:[#allocation2 + $0x354] sm:$0xff]
    %v207 = vld [vmem:[#allocation2 + $0x35c] sm:$0xf]
    %v208 = vld [vmem:[#allocation2 + $0x360] sm:$0xff]
    %v209 = vld [vmem:[#allocation2 + $0x368] sm:$0xf]
    %v210 = vld [vmem:[#allocation2 + $0x36c] sm:$0xff]
    %v211 = vld [vmem:[#allocation2 + $0x374] sm:$0xf]
    %v212 = vld [vmem:[#allocation2 + $0x378] sm:$0xff]
    %v213 = vld [vmem:[#allocation2 + $0x380] sm:$0xf]
    %v214 = vld [vmem:[#allocation2 + $0x384] sm:$0xff]
    %v215 = vld [vmem:[#allocation2 + $0x38c] sm:$0xf]
    %v216 = vld [vmem:[#allocation2 + $0x390] sm:$0xff]
    %v217 = vld [vmem:[#allocation2 + $0x398] sm:$0xf]
    %v218 = vld [vmem:[#allocation2 + $0x39c] sm:$0xff]
    %v219 = vld [vmem:[#allocation2 + $0x3a4] sm:$0xf]
    %v220 = vld [vmem:[#allocation2 + $0x3a8] sm:$0xff]
    %v221 = vld [vmem:[#allocation2 + $0x3b0] sm:$0xf]
    %v222 = vld [vmem:[#allocation2 + $0x3b4] sm:$0xff]
    %v223 = vld [vmem:[#allocation2 + $0x3bc] sm:$0xf]
    %v224 = vld [vmem:[#allocation2 + $0x3c0] sm:$0xff]
    %v225 = vld [vmem:[#allocation2 + $0x3c8] sm:$0xf]
    %v226 = vld [vmem:[#allocation2 + $0x3cc] sm:$0xff]
    %v227 = vld [vmem:[#allocation2 + $0x3d4] sm:$0xf]
    %v228 = vld [vmem:[#allocation2 + $0x3d8] sm:$0xff]
    %v229 = vld [vmem:[#allocation2 + $0x3e0] sm:$0xf]
    %v230 = vld [vmem:[#allocation2 + $0x3e4] sm:$0xff]
    %v231 = vld [vmem:[#allocation2 + $0x3ec] sm:$0xf]
    %v232 = vld [vmem:[#allocation2 + $0x3f0] sm:$0xff]
    %v233 = vld [vmem:[#allocation2 + $0x3f8] sm:$0xf]
    %v234 = vld [vmem:[#allocation2 + $0x3fc] sm:$0xff]
    %v235 = vld [vmem:[#allocation2 + $0x404] sm:$0xf]
    %v236 = vld [vmem:[#allocation2 + $0x408] sm:$0xff]
    %v237 = vld [vmem:[#allocation2 + $0x410] sm:$0xf]
    %v238 = vld [vmem:[#allocation2 + $0x414] sm:$0xff]
    %v239 = vld [vmem:[#allocation2 + $0x41c] sm:$0xf]
    %v240 = vld [vmem:[#allocation2 + $0x420] sm:$0xff]
    %v241 = vld [vmem:[#allocation2 + $0x428] sm:$0xf]
    %v242 = vld [vmem:[#allocation2 + $0x42c] sm:$0xff]
    %v243 = vld [vmem:[#allocation2 + $0x434] sm:$0xf]
    %v244 = vld [vmem:[#allocation2 + $0x438] sm:$0xff]
    %v245 = vld [vmem:[#allocation2 + $0x440] sm:$0xf]
    %v246 = vld [vmem:[#allocation2 + $0x444] sm:$0xff]
    %v247 = vld [vmem:[#allocation2 + $0x44c] sm:$0xf]
    %v248 = vld [vmem:[#allocation2 + $0x450] sm:$0xff]
    %v249 = vld [vmem:[#allocation2 + $0x458] sm:$0xf]
    %v250 = vld [vmem:[#allocation2 + $0x45c] sm:$0xff]
    %v251 = vld [vmem:[#allocation2 + $0x464] sm:$0xf]
    %v252 = vld [vmem:[#allocation2 + $0x468] sm:$0xff]
    %v253 = vld [vmem:[#allocation2 + $0x470] sm:$0xf]
    %v254 = vld [vmem:[#allocation2 + $0x474] sm:$0xff]
    %v255 = vld [vmem:[#allocation2 + $0x47c] sm:$0xf]
    %v256 = vld [vmem:[#allocation2 + $0x480] sm:$0xff]
    %v257 = vld [vmem:[#allocation2 + $0x488] sm:$0xf]
    %v258 = vld [vmem:[#allocation2 + $0x48c] sm:$0xff]
    %v259 = vld [vmem:[#allocation2 + $0x494] sm:$0xf]
    %v456 = vunpack.c.l.b16 %v64
    %v457 = vunpack.c.h.b16 %v64
    %v458 = vunpack.c.l.b16 %v65
    %v459 = vunpack.c.l.b16 %v66
    %v460 = vunpack.c.h.b16 %v66
    %v461 = vunpack.c.l.b16 %v67
    %v462 = vunpack.c.l.b16 %v68
    %v463 = vunpack.c.h.b16 %v68
    %v464 = vunpack.c.l.b16 %v69
    %v465 = vunpack.c.l.b16 %v70
    %v466 = vunpack.c.h.b16 %v70
    %v467 = vunpack.c.l.b16 %v71
    %v468 = vunpack.c.l.b16 %v72
    %v469 = vunpack.c.h.b16 %v72
    %v470 = vunpack.c.l.b16 %v73
    %v471 = vunpack.c.l.b16 %v74
    %v472 = vunpack.c.h.b16 %v74
    %v473 = vunpack.c.l.b16 %v75
    %v474 = vunpack.c.l.b16 %v76
    %v475 = vunpack.c.h.b16 %v76
    %v476 = vunpack.c.l.b16 %v77
    %v477 = vunpack.c.l.b16 %v78
    %v478 = vunpack.c.h.b16 %v78
    %v479 = vunpack.c.l.b16 %v79
    %v480 = vunpack.c.l.b16 %v80
    %v481 = vunpack.c.h.b16 %v80
    %v482 = vunpack.c.l.b16 %v81
    %v483 = vunpack.c.l.b16 %v82
    %v484 = vunpack.c.h.b16 %v82
    %v485 = vunpack.c.l.b16 %v83
    %v486 = vunpack.c.l.b16 %v84
    %v487 = vunpack.c.h.b16 %v84
    %v488 = vunpack.c.l.b16 %v85
    %v489 = vunpack.c.l.b16 %v86
    %v490 = vunpack.c.h.b16 %v86
    %v491 = vunpack.c.l.b16 %v87
    %v492 = vunpack.c.l.b16 %v88
    %v493 = vunpack.c.h.b16 %v88
    %v494 = vunpack.c.l.b16 %v89
    %v495 = vunpack.c.l.b16 %v90
    %v496 = vunpack.c.h.b16 %v90
    %v497 = vunpack.c.l.b16 %v91
    %v498 = vunpack.c.l.b16 %v92
    %v499 = vunpack.c.h.b16 %v92
    %v500 = vunpack.c.l.b16 %v93
    %v501 = vunpack.c.l.b16 %v94
    %v502 = vunpack.c.h.b16 %v94
    %v503 = vunpack.c.l.b16 %v95
    %v504 = vunpack.c.l.b16 %v96
    %v505 = vunpack.c.h.b16 %v96
    %v506 = vunpack.c.l.b16 %v97
    %v507 = vunpack.c.l.b16 %v98
    %v508 = vunpack.c.h.b16 %v98
    %v509 = vunpack.c.l.b16 %v99
    %v510 = vunpack.c.l.b16 %v100
    %v511 = vunpack.c.h.b16 %v100
    %v512 = vunpack.c.l.b16 %v101
    %v513 = vunpack.c.l.b16 %v102
    %v514 = vunpack.c.h.b16 %v102
    %v515 = vunpack.c.l.b16 %v103
    %v516 = vunpack.c.l.b16 %v104
    %v517 = vunpack.c.h.b16 %v104
    %v518 = vunpack.c.l.b16 %v105
    %v519 = vunpack.c.l.b16 %v106
    %v520 = vunpack.c.h.b16 %v106
    %v521 = vunpack.c.l.b16 %v107
    %v522 = vunpack.c.l.b16 %v108
    %v523 = vunpack.c.h.b16 %v108
    %v524 = vunpack.c.l.b16 %v109
    %v525 = vunpack.c.l.b16 %v110
    %v526 = vunpack.c.h.b16 %v110
    %v527 = vunpack.c.l.b16 %v111
    %v528 = vunpack.c.l.b16 %v112
    %v529 = vunpack.c.h.b16 %v112
    %v530 = vunpack.c.l.b16 %v113
    %v531 = vunpack.c.l.b16 %v114
    %v532 = vunpack.c.h.b16 %v114
    %v533 = vunpack.c.l.b16 %v115
    %v534 = vunpack.c.l.b16 %v116
    %v535 = vunpack.c.h.b16 %v116
    %v536 = vunpack.c.l.b16 %v117
    %v537 = vunpack.c.l.b16 %v118
    %v538 = vunpack.c.h.b16 %v118
    %v539 = vunpack.c.l.b16 %v119
    %v540 = vunpack.c.l.b16 %v120
    %v541 = vunpack.c.h.b16 %v120
    %v542 = vunpack.c.l.b16 %v121
    %v543 = vunpack.c.l.b16 %v122
    %v544 = vunpack.c.h.b16 %v122
    %v545 = vunpack.c.l.b16 %v123
    %v546 = vunpack.c.l.b16 %v124
    %v547 = vunpack.c.h.b16 %v124
    %v548 = vunpack.c.l.b16 %v125
    %v549 = vunpack.c.l.b16 %v126
    %v550 = vunpack.c.h.b16 %v126
    %v551 = vunpack.c.l.b16 %v127
    %v552 = vunpack.c.l.b16 %v128
    %v553 = vunpack.c.h.b16 %v128
    %v554 = vunpack.c.l.b16 %v129
    %v555 = vunpack.c.l.b16 %v130
    %v556 = vunpack.c.h.b16 %v130
    %v557 = vunpack.c.l.b16 %v131
    %v558 = vunpack.c.l.b16 %v132
    %v559 = vunpack.c.h.b16 %v132
    %v560 = vunpack.c.l.b16 %v133
    %v561 = vunpack.c.l.b16 %v134
    %v562 = vunpack.c.h.b16 %v134
    %v563 = vunpack.c.l.b16 %v135
    %v564 = vunpack.c.l.b16 %v136
    %v565 = vunpack.c.h.b16 %v136
    %v566 = vunpack.c.l.b16 %v137
    %v567 = vunpack.c.l.b16 %v138
    %v568 = vunpack.c.h.b16 %v138
    %v569 = vunpack.c.l.b16 %v139
    %v570 = vunpack.c.l.b16 %v140
    %v571 = vunpack.c.h.b16 %v140
    %v572 = vunpack.c.l.b16 %v141
    %v573 = vunpack.c.l.b16 %v142
    %v574 = vunpack.c.h.b16 %v142
    %v575 = vunpack.c.l.b16 %v143
    %v576 = vunpack.c.l.b16 %v144
    %v577 = vunpack.c.h.b16 %v144
    %v578 = vunpack.c.l.b16 %v145
    %v579 = vunpack.c.l.b16 %v146
    %v580 = vunpack.c.h.b16 %v146
    %v581 = vunpack.c.l.b16 %v147
    %v582 = vunpack.c.l.b16 %v148
    %v583 = vunpack.c.h.b16 %v148
    %v584 = vunpack.c.l.b16 %v149
    %v585 = vunpack.c.l.b16 %v150
    %v586 = vunpack.c.h.b16 %v150
    %v587 = vunpack.c.l.b16 %v151
    %v588 = vunpack.c.l.b16 %v152
    %v589 = vunpack.c.h.b16 %v152
    %v590 = vunpack.c.l.b16 %v153
    %v591 = vunpack.c.l.b16 %v154
    %v592 = vunpack.c.h.b16 %v154
    %v593 = vunpack.c.l.b16 %v155
    %v594 = vunpack.c.l.b16 %v156
    %v595 = vunpack.c.h.b16 %v156
    %v596 = vunpack.c.l.b16 %v157
    %v597 = vunpack.c.l.b16 %v158
    %v598 = vunpack.c.h.b16 %v158
    %v599 = vunpack.c.l.b16 %v159
    %v600 = vunpack.c.l.b16 %v160
    %v601 = vunpack.c.h.b16 %v160
    %v602 = vunpack.c.l.b16 %v161
    %v603 = vunpack.c.l.b16 %v162
    %v604 = vunpack.c.h.b16 %v162
    %v605 = vunpack.c.l.b16 %v163
    %v606 = vunpack.c.l.b16 %v164
    %v607 = vunpack.c.h.b16 %v164
    %v608 = vunpack.c.l.b16 %v165
    %v609 = vunpack.c.l.b16 %v166
    %v610 = vunpack.c.h.b16 %v166
    %v611 = vunpack.c.l.b16 %v167
    %v612 = vunpack.c.l.b16 %v168
    %v613 = vunpack.c.h.b16 %v168
    %v614 = vunpack.c.l.b16 %v169
    %v615 = vunpack.c.l.b16 %v170
    %v616 = vunpack.c.h.b16 %v170
    %v617 = vunpack.c.l.b16 %v171
    %v618 = vunpack.c.l.b16 %v172
    %v619 = vunpack.c.h.b16 %v172
    %v620 = vunpack.c.l.b16 %v173
    %v621 = vunpack.c.l.b16 %v174
    %v622 = vunpack.c.h.b16 %v174
    %v623 = vunpack.c.l.b16 %v175
    %v624 = vunpack.c.l.b16 %v176
    %v625 = vunpack.c.h.b16 %v176
    %v626 = vunpack.c.l.b16 %v177
    %v627 = vunpack.c.l.b16 %v178
    %v628 = vunpack.c.h.b16 %v178
    %v629 = vunpack.c.l.b16 %v179
    %v630 = vunpack.c.l.b16 %v180
    %v631 = vunpack.c.h.b16 %v180
    %v632 = vunpack.c.l.b16 %v181
    %v633 = vunpack.c.l.b16 %v182
    %v634 = vunpack.c.h.b16 %v182
    %v635 = vunpack.c.l.b16 %v183
    %v636 = vunpack.c.l.b16 %v184
    %v637 = vunpack.c.h.b16 %v184
    %v638 = vunpack.c.l.b16 %v185
    %v639 = vunpack.c.l.b16 %v186
    %v640 = vunpack.c.h.b16 %v186
    %v641 = vunpack.c.l.b16 %v187
    %v642 = vunpack.c.l.b16 %v188
    %v643 = vunpack.c.h.b16 %v188
    %v644 = vunpack.c.l.b16 %v189
    %v645 = vunpack.c.l.b16 %v190
    %v646 = vunpack.c.h.b16 %v190
    %v647 = vunpack.c.l.b16 %v191
    %v648 = vunpack.c.l.b16 %v192
    %v649 = vunpack.c.h.b16 %v192
    %v650 = vunpack.c.l.b16 %v193
    %v651 = vunpack.c.l.b16 %v194
    %v652 = vunpack.c.h.b16 %v194
    %v653 = vunpack.c.l.b16 %v195
    %v654 = vunpack.c.l.b16 %v196
    %v655 = vunpack.c.h.b16 %v196
    %v656 = vunpack.c.l.b16 %v197
    %v657 = vunpack.c.l.b16 %v198
    %v658 = vunpack.c.h.b16 %v198
    %v659 = vunpack.c.l.b16 %v199
    %v660 = vunpack.c.l.b16 %v200
    %v661 = vunpack.c.h.b16 %v200
    %v662 = vunpack.c.l.b16 %v201
    %v663 = vunpack.c.l.b16 %v202
    %v664 = vunpack.c.h.b16 %v202
    %v665 = vunpack.c.l.b16 %v203
    %v666 = vunpack.c.l.b16 %v204
    %v667 = vunpack.c.h.b16 %v204
    %v668 = vunpack.c.l.b16 %v205
    %v669 = vunpack.c.l.b16 %v206
    %v670 = vunpack.c.h.b16 %v206
    %v671 = vunpack.c.l.b16 %v207
    %v672 = vunpack.c.l.b16 %v208
    %v673 = vunpack.c.h.b16 %v208
    %v674 = vunpack.c.l.b16 %v209
    %v675 = vunpack.c.l.b16 %v210
    %v676 = vunpack.c.h.b16 %v210
    %v677 = vunpack.c.l.b16 %v211
    %v678 = vunpack.c.l.b16 %v212
    %v679 = vunpack.c.h.b16 %v212
    %v680 = vunpack.c.l.b16 %v213
    %v681 = vunpack.c.l.b16 %v214
    %v682 = vunpack.c.h.b16 %v214
    %v683 = vunpack.c.l.b16 %v215
    %v684 = vunpack.c.l.b16 %v216
    %v685 = vunpack.c.h.b16 %v216
    %v686 = vunpack.c.l.b16 %v217
    %v687 = vunpack.c.l.b16 %v218
    %v688 = vunpack.c.h.b16 %v218
    %v689 = vunpack.c.l.b16 %v219
    %v690 = vunpack.c.l.b16 %v220
    %v691 = vunpack.c.h.b16 %v220
    %v692 = vunpack.c.l.b16 %v221
    %v693 = vunpack.c.l.b16 %v222
    %v694 = vunpack.c.h.b16 %v222
    %v695 = vunpack.c.l.b16 %v223
    %v696 = vunpack.c.l.b16 %v224
    %v697 = vunpack.c.h.b16 %v224
    %v698 = vunpack.c.l.b16 %v225
    %v699 = vunpack.c.l.b16 %v226
    %v700 = vunpack.c.h.b16 %v226
    %v701 = vunpack.c.l.b16 %v227
    %v702 = vunpack.c.l.b16 %v228
    %v703 = vunpack.c.h.b16 %v228
    %v704 = vunpack.c.l.b16 %v229
    %v705 = vunpack.c.l.b16 %v230
    %v706 = vunpack.c.h.b16 %v230
    %v707 = vunpack.c.l.b16 %v231
    %v708 = vunpack.c.l.b16 %v232
    %v709 = vunpack.c.h.b16 %v232
    %v710 = vunpack.c.l.b16 %v233
    %v711 = vunpack.c.l.b16 %v234
    %v712 = vunpack.c.h.b16 %v234
    %v713 = vunpack.c.l.b16 %v235
    %v714 = vunpack.c.l.b16 %v236
    %v715 = vunpack.c.h.b16 %v236
    %v716 = vunpack.c.l.b16 %v237
    %v717 = vunpack.c.l.b16 %v238
    %v718 = vunpack.c.h.b16 %v238
    %v719 = vunpack.c.l.b16 %v239
    %v720 = vunpack.c.l.b16 %v240
    %v721 = vunpack.c.h.b16 %v240
    %v722 = vunpack.c.l.b16 %v241
    %v723 = vunpack.c.l.b16 %v242
    %v724 = vunpack.c.h.b16 %v242
    %v725 = vunpack.c.l.b16 %v243
    %v726 = vunpack.c.l.b16 %v244
    %v727 = vunpack.c.h.b16 %v244
    %v728 = vunpack.c.l.b16 %v245
    %v729 = vunpack.c.l.b16 %v246
    %v730 = vunpack.c.h.b16 %v246
    %v731 = vunpack.c.l.b16 %v247
    %v732 = vunpack.c.l.b16 %v248
    %v733 = vunpack.c.h.b16 %v248
    %v734 = vunpack.c.l.b16 %v249
    %v735 = vunpack.c.l.b16 %v250
    %v736 = vunpack.c.h.b16 %v250
    %v737 = vunpack.c.l.b16 %v251
    %v738 = vunpack.c.l.b16 %v252
    %v739 = vunpack.c.h.b16 %v252
    %v740 = vunpack.c.l.b16 %v253
    %v741 = vunpack.c.l.b16 %v254
    %v742 = vunpack.c.h.b16 %v254
    %v743 = vunpack.c.l.b16 %v255
    %v744 = vunpack.c.l.b16 %v256
    %v745 = vunpack.c.h.b16 %v256
    %v746 = vunpack.c.l.b16 %v257
    %v747 = vunpack.c.l.b16 %v258
    %v748 = vunpack.c.h.b16 %v258
    %v749 = vunpack.c.l.b16 %v259
    %v750 = vpack.c.b16 %v459, %v456
    %v751 = vpack.c.b16 %v460, %v457
    %v752 = vpack.c.b16 %v461, %v458
    %v753 = vpack.c.b16 %v465, %v462
    %v754 = vpack.c.b16 %v466, %v463
    %v755 = vpack.c.b16 %v467, %v464
    %v756 = vpack.c.b16 %v471, %v468
    %v757 = vpack.c.b16 %v472, %v469
    %v758 = vpack.c.b16 %v473, %v470
    %v759 = vpack.c.b16 %v477, %v474
    %v760 = vpack.c.b16 %v478, %v475
    %v761 = vpack.c.b16 %v479, %v476
    %v762 = vpack.c.b16 %v483, %v480
    %v763 = vpack.c.b16 %v484, %v481
    %v764 = vpack.c.b16 %v485, %v482
    %v765 = vpack.c.b16 %v489, %v486
    %v766 = vpack.c.b16 %v490, %v487
    %v767 = vpack.c.b16 %v491, %v488
    %v768 = vpack.c.b16 %v495, %v492
    %v769 = vpack.c.b16 %v496, %v493
    %v770 = vpack.c.b16 %v497, %v494
    %v771 = vpack.c.b16 %v501, %v498
    %v772 = vpack.c.b16 %v502, %v499
    %v773 = vpack.c.b16 %v503, %v500
    %v774 = vpack.c.b16 %v507, %v504
    %v775 = vpack.c.b16 %v508, %v505
    %v776 = vpack.c.b16 %v509, %v506
    %v777 = vpack.c.b16 %v513, %v510
    %v778 = vpack.c.b16 %v514, %v511
    %v779 = vpack.c.b16 %v515, %v512
    %v780 = vpack.c.b16 %v519, %v516
    %v781 = vpack.c.b16 %v520, %v517
    %v782 = vpack.c.b16 %v521, %v518
    %v783 = vpack.c.b16 %v525, %v522
    %v784 = vpack.c.b16 %v526, %v523
    %v785 = vpack.c.b16 %v527, %v524
    %v786 = vpack.c.b16 %v531, %v528
    %v787 = vpack.c.b16 %v532, %v529
    %v788 = vpack.c.b16 %v533, %v530
    %v789 = vpack.c.b16 %v537, %v534
    %v790 = vpack.c.b16 %v538, %v535
    %v791 = vpack.c.b16 %v539, %v536
    %v792 = vpack.c.b16 %v543, %v540
    %v793 = vpack.c.b16 %v544, %v541
    %v794 = vpack.c.b16 %v545, %v542
    %v795 = vpack.c.b16 %v549, %v546
    %v796 = vpack.c.b16 %v550, %v547
    %v797 = vpack.c.b16 %v551, %v548
    %v798 = vpack.c.b16 %v555, %v552
    %v799 = vpack.c.b16 %v556, %v553
    %v800 = vpack.c.b16 %v557, %v554
    %v801 = vpack.c.b16 %v561, %v558
    %v802 = vpack.c.b16 %v562, %v559
    %v803 = vpack.c.b16 %v563, %v560
    %v804 = vpack.c.b16 %v567, %v564
    %v805 = vpack.c.b16 %v568, %v565
    %v806 = vpack.c.b16 %v569, %v566
    %v807 = vpack.c.b16 %v573, %v570
    %v808 = vpack.c.b16 %v574, %v571
    %v809 = vpack.c.b16 %v575, %v572
    %v810 = vpack.c.b16 %v579, %v576
    %v811 = vpack.c.b16 %v580, %v577
    %v812 = vpack.c.b16 %v581, %v578
    %v813 = vpack.c.b16 %v585, %v582
    %v814 = vpack.c.b16 %v586, %v583
    %v815 = vpack.c.b16 %v587, %v584
    %v816 = vpack.c.b16 %v591, %v588
    %v817 = vpack.c.b16 %v592, %v589
    %v818 = vpack.c.b16 %v593, %v590
    %v819 = vpack.c.b16 %v597, %v594
    %v820 = vpack.c.b16 %v598, %v595
    %v821 = vpack.c.b16 %v599, %v596
    %v822 = vpack.c.b16 %v603, %v600
    %v823 = vpack.c.b16 %v604, %v601
    %v824 = vpack.c.b16 %v605, %v602
    %v825 = vpack.c.b16 %v609, %v606
    %v826 = vpack.c.b16 %v610, %v607
    %v827 = vpack.c.b16 %v611, %v608
    %v828 = vpack.c.b16 %v615, %v612
    %v829 = vpack.c.b16 %v616, %v613
    %v830 = vpack.c.b16 %v617, %v614
    %v831 = vpack.c.b16 %v621, %v618
    %v832 = vpack.c.b16 %v622, %v619
    %v833 = vpack.c.b16 %v623, %v620
    %v834 = vpack.c.b16 %v627, %v624
    %v835 = vpack.c.b16 %v628, %v625
    %v836 = vpack.c.b16 %v629, %v626
    %v837 = vpack.c.b16 %v633, %v630
    %v838 = vpack.c.b16 %v634, %v631
    %v839 = vpack.c.b16 %v635, %v632
    %v840 = vpack.c.b16 %v639, %v636
    %v841 = vpack.c.b16 %v640, %v637
    %v842 = vpack.c.b16 %v641, %v638
    %v843 = vpack.c.b16 %v645, %v642
    %v844 = vpack.c.b16 %v646, %v643
    %v845 = vpack.c.b16 %v647, %v644
    %v846 = vpack.c.b16 %v651, %v648
    %v847 = vpack.c.b16 %v652, %v649
    %v848 = vpack.c.b16 %v653, %v650
    %v849 = vpack.c.b16 %v657, %v654
    %v850 = vpack.c.b16 %v658, %v655
    %v851 = vpack.c.b16 %v659, %v656
    %v852 = vpack.c.b16 %v663, %v660
    %v853 = vpack.c.b16 %v664, %v661
    %v854 = vpack.c.b16 %v665, %v662
    %v855 = vpack.c.b16 %v669, %v666
    %v856 = vpack.c.b16 %v670, %v667
    %v857 = vpack.c.b16 %v671, %v668
    %v858 = vpack.c.b16 %v675, %v672
    %v859 = vpack.c.b16 %v676, %v673
    %v860 = vpack.c.b16 %v677, %v674
    %v861 = vpack.c.b16 %v681, %v678
    %v862 = vpack.c.b16 %v682, %v679
    %v863 = vpack.c.b16 %v683, %v680
    %v864 = vpack.c.b16 %v687, %v684
    %v865 = vpack.c.b16 %v688, %v685
    %v866 = vpack.c.b16 %v689, %v686
    %v867 = vpack.c.b16 %v693, %v690
    %v868 = vpack.c.b16 %v694, %v691
    %v869 = vpack.c.b16 %v695, %v692
    %v870 = vpack.c.b16 %v699, %v696
    %v871 = vpack.c.b16 %v700, %v697
    %v872 = vpack.c.b16 %v701, %v698
    %v873 = vpack.c.b16 %v705, %v702
    %v874 = vpack.c.b16 %v706, %v703
    %v875 = vpack.c.b16 %v707, %v704
    %v876 = vpack.c.b16 %v711, %v708
    %v877 = vpack.c.b16 %v712, %v709
    %v878 = vpack.c.b16 %v713, %v710
    %v879 = vpack.c.b16 %v717, %v714
    %v880 = vpack.c.b16 %v718, %v715
    %v881 = vpack.c.b16 %v719, %v716
    %v882 = vpack.c.b16 %v723, %v720
    %v883 = vpack.c.b16 %v724, %v721
    %v884 = vpack.c.b16 %v725, %v722
    %v885 = vpack.c.b16 %v729, %v726
    %v886 = vpack.c.b16 %v730, %v727
    %v887 = vpack.c.b16 %v731, %v728
    %v888 = vpack.c.b16 %v735, %v732
    %v889 = vpack.c.b16 %v736, %v733
    %v890 = vpack.c.b16 %v737, %v734
    %v891 = vpack.c.b16 %v741, %v738
    %v892 = vpack.c.b16 %v742, %v739
    %v893 = vpack.c.b16 %v743, %v740
    %v894 = vpack.c.b16 %v747, %v744
    %v895 = vpack.c.b16 %v748, %v745
    %v896 = vpack.c.b16 %v749, %v746
    %vm1044 = vcmask 130048
    %v1046 = vsel %vm1044, %v63, 0
    %1048 = vmatprep.subr.bf16.mxu0 %v751
    %1049 = vmatpush1.bf16.msra.mxu0 %v750
    %1050 = vmatprep.subr.bf16.mxu0 %v754
    %1051 = vmatpush1.bf16.msra.mxu0 %v753
    %1052 = vmatprep.subr.bf16.mxu0 %v757
    %1053 = vmatpush1.bf16.msra.mxu0 %v756
    %1054 = vmatprep.subr.bf16.mxu0 %v760
    %1055 = vmatpush1.bf16.msra.mxu0 %v759
    %1056 = vmatprep.subr.bf16.mxu0 %v763
    %1057 = vmatpush1.bf16.msra.mxu0 %v762
    %1058 = vmatprep.subr.bf16.mxu0 %v766
    %1059 = vmatpush1.bf16.msra.mxu0 %v765
    %1060 = vmatprep.subr.bf16.mxu0 %v769
    %1061 = vmatpush1.bf16.msra.mxu0 %v768
    %1062 = vmatprep.subr.bf16.mxu0 %v772
    %1063 = vmatpush1.bf16.msra.mxu0 %v771
    %1064 = vmatprep.subr.bf16.mxu0 %v775
    %1065 = vmatpush1.bf16.msra.mxu0 %v774
    %1066 = vmatprep.subr.bf16.mxu0 %v778
    %1067 = vmatpush1.bf16.msra.mxu0 %v777
    %1068 = vmatprep.subr.bf16.mxu0 %v781
    %1069 = vmatpush1.bf16.msra.mxu0 %v780
    %1070 = vmatprep.subr.bf16.mxu0 %v784
    %1071 = vmatpush1.bf16.msra.mxu0 %v783
    %1072 = vmatprep.subr.bf16.mxu0 %v787
    %1073 = vmatpush1.bf16.msra.mxu0 %v786
    %1074 = vmatprep.subr.bf16.mxu0 %v790
    %1075 = vmatpush1.bf16.msra.mxu0 %v789
    %1076 = vmatprep.subr.bf16.mxu0 %v793
    %1077 = vmatpush1.bf16.msra.mxu0 %v792
    %1078 = vmatprep.subr.bf16.mxu0 %v796
    %1079 = vmatpush1.bf16.msra.mxu0 %v795
    %1080 = vmatprep.mubr.bf16.mxu0 %v58
    %1081 = vmatmul.mubr.bf16.gmra.mrb[0].mxu0 %v57
    %v1082 = vpop.f32.mrb[0].mxu0
    %v1083 = vadd.f32 0.0, %v1082
    %v1084 = vpop.f32.mrb[0].mxu0
    %v1085 = vadd.f32 0.0, %v1084
    %v1086 = vpop.f32.mrb[0].mxu0
    %v1087 = vpop.f32.mrb[0].mxu0
    %1088 = vdwg.mxu0
    %1089 = vmatprep.subr.bf16.mxu0 %v799
    %1090 = vmatpush1.bf16.msra.mxu0 %v798
    %1091 = vmatprep.subr.bf16.mxu0 %v802
    %1092 = vmatpush1.bf16.msra.mxu0 %v801
    %1093 = vmatprep.subr.bf16.mxu0 %v805
    %1094 = vmatpush1.bf16.msra.mxu0 %v804
    %1095 = vmatprep.subr.bf16.mxu0 %v808
    %1096 = vmatpush1.bf16.msra.mxu0 %v807
    %1097 = vmatprep.subr.bf16.mxu0 %v811
    %1098 = vmatpush1.bf16.msra.mxu0 %v810
    %1099 = vmatprep.subr.bf16.mxu0 %v814
    %1100 = vmatpush1.bf16.msra.mxu0 %v813
    %1101 = vmatprep.subr.bf16.mxu0 %v817
    %1102 = vmatpush1.bf16.msra.mxu0 %v816
    %1103 = vmatprep.subr.bf16.mxu0 %v820
    %1104 = vmatpush1.bf16.msra.mxu0 %v819
    %1105 = vmatprep.subr.bf16.mxu0 %v823
    %1106 = vmatpush1.bf16.msra.mxu0 %v822
    %1107 = vmatprep.subr.bf16.mxu0 %v826
    %1108 = vmatpush1.bf16.msra.mxu0 %v825
    %1109 = vmatprep.subr.bf16.mxu0 %v829
    %1110 = vmatpush1.bf16.msra.mxu0 %v828
    %1111 = vmatprep.subr.bf16.mxu0 %v832
    %1112 = vmatpush1.bf16.msra.mxu0 %v831
    %1113 = vmatprep.subr.bf16.mxu0 %v835
    %1114 = vmatpush1.bf16.msra.mxu0 %v834
    %1115 = vmatprep.subr.bf16.mxu0 %v838
    %1116 = vmatpush1.bf16.msra.mxu0 %v837
    %1117 = vmatprep.subr.bf16.mxu0 %v841
    %1118 = vmatpush1.bf16.msra.mxu0 %v840
    %1119 = vmatprep.subr.bf16.mxu0 %v844
    %1120 = vmatpush1.bf16.msra.mxu0 %v843
    %1121 = vmatprep.mubr.bf16.mxu0 %v60
    %1122 = vmatmul.mubr.bf16.gmra.mrb[0].mxu0 %v59
    %v1123 = vpop.f32.mrb[0].mxu0
    %v1124 = vadd.f32 %v1083, %v1123
    %v1125 = vpop.f32.mrb[0].mxu0
    %v1126 = vadd.f32 %v1085, %v1125
    %v1127 = vpop.f32.mrb[0].mxu0
    %v1128 = vpop.f32.mrb[0].mxu0
    %1129 = vdwg.mxu0
    %1130 = vmatprep.subr.bf16.mxu0 %v847
    %1131 = vmatpush1.bf16.msra.mxu0 %v846
    %1132 = vmatprep.subr.bf16.mxu0 %v850
    %1133 = vmatpush1.bf16.msra.mxu0 %v849
    %1134 = vmatprep.subr.bf16.mxu0 %v853
    %1135 = vmatpush1.bf16.msra.mxu0 %v852
    %1136 = vmatprep.subr.bf16.mxu0 %v856
    %1137 = vmatpush1.bf16.msra.mxu0 %v855
    %1138 = vmatprep.subr.bf16.mxu0 %v859
    %1139 = vmatpush1.bf16.msra.mxu0 %v858
    %1140 = vmatprep.subr.bf16.mxu0 %v862
    %1141 = vmatpush1.bf16.msra.mxu0 %v861
    %1142 = vmatprep.subr.bf16.mxu0 %v865
    %1143 = vmatpush1.bf16.msra.mxu0 %v864
    %1144 = vmatprep.subr.bf16.mxu0 %v868
    %1145 = vmatpush1.bf16.msra.mxu0 %v867
    %1146 = vmatprep.subr.bf16.mxu0 %v871
    %1147 = vmatpush1.bf16.msra.mxu0 %v870
    %1148 = vmatprep.subr.bf16.mxu0 %v874
    %1149 = vmatpush1.bf16.msra.mxu0 %v873
    %1150 = vmatprep.subr.bf16.mxu0 %v877
    %1151 = vmatpush1.bf16.msra.mxu0 %v876
    %1152 = vmatprep.subr.bf16.mxu0 %v880
    %1153 = vmatpush1.bf16.msra.mxu0 %v879
    %1154 = vmatprep.subr.bf16.mxu0 %v883
    %1155 = vmatpush1.bf16.msra.mxu0 %v882
    %1156 = vmatprep.subr.bf16.mxu0 %v886
    %1157 = vmatpush1.bf16.msra.mxu0 %v885
    %1158 = vmatprep.subr.bf16.mxu0 %v889
    %1159 = vmatpush1.bf16.msra.mxu0 %v888
    %1160 = vmatprep.subr.bf16.mxu0 %v892
    %1161 = vmatpush1.bf16.msra.mxu0 %v891
    %1162 = vmatprep.mubr.bf16.mxu0 %v62
    %1163 = vmatmul.mubr.bf16.gmra.mrb[0].mxu0 %v61
    %v1164 = vpop.f32.mrb[0].mxu0
    %v1165 = vadd.f32 %v1124, %v1164
    %v1166 = vpop.f32.mrb[0].mxu0
    %v1167 = vadd.f32 %v1126, %v1166
    %v1168 = vpop.f32.mrb[0].mxu0
    %v1169 = vpop.f32.mrb[0].mxu0
    %1170 = vdwg.mxu0
    %1171 = vmatprep.subr.bf16.mxu0 %v895
    %1172 = vmatpush1.bf16.msra.mxu0 %v894
    %1173 = vmatprep.subr.bf16.mxu0 0
    %1174 = vmatpush1.bf16.msra.mxu0 0
    %1175 = vmatprep.subr.bf16.mxu0 0
    %1176 = vmatpush1.bf16.msra.mxu0 0
    %1177 = vmatprep.subr.bf16.mxu0 0
    %1178 = vmatpush1.bf16.msra.mxu0 0
    %1179 = vmatprep.subr.bf16.mxu0 0
    %1180 = vmatpush1.bf16.msra.mxu0 0
    %1181 = vmatprep.subr.bf16.mxu0 0
    %1182 = vmatpush1.bf16.msra.mxu0 0
    %1183 = vmatprep.subr.bf16.mxu0 0
    %1184 = vmatpush1.bf16.msra.mxu0 0
    %1185 = vmatprep.subr.bf16.mxu0 0
    %1186 = vmatpush1.bf16.msra.mxu0 0
    %1187 = vmatprep.subr.bf16.mxu0 0
    %1188 = vmatpush1.bf16.msra.mxu0 0
    %1189 = vmatprep.subr.bf16.mxu0 0
    %1190 = vmatpush1.bf16.msra.mxu0 0
    %1191 = vmatprep.subr.bf16.mxu0 0
    %1192 = vmatpush1.bf16.msra.mxu0 0
    %1193 = vmatprep.subr.bf16.mxu0 0
    %1194 = vmatpush1.bf16.msra.mxu0 0
    %1195 = vmatprep.subr.bf16.mxu0 0
    %1196 = vmatpush1.bf16.msra.mxu0 0
    %1197 = vmatprep.subr.bf16.mxu0 0
    %1198 = vmatpush1.bf16.msra.mxu0 0
    %1199 = vmatprep.subr.bf16.mxu0 0
    %1200 = vmatpush1.bf16.msra.mxu0 0
    %1201 = vmatprep.subr.bf16.mxu0 0
    %1202 = vmatpush1.bf16.msra.mxu0 0
    %1203 = vmatprep.mubr.bf16.mxu0 0
    %1204 = vmatmul.mubr.bf16.gmra.mrb[0].mxu0 %v1046
    %v1205 = vpop.f32.mrb[0].mxu0
    %v1206 = vadd.f32 %v1165, %v1205
    %v1207 = vpop.f32.mrb[0].mxu0
    %v1208 = vadd.f32 %v1167, %v1207
    %v1209 = vpop.f32.mrb[0].mxu0
    %v1210 = vpop.f32.mrb[0].mxu0
    %1211 = vdwg.mxu0
    %1212 = vmatprep.subr.bf16.mxu0 0
    %1213 = vmatpush1.bf16.msra.mxu0 %v752
    %1214 = vmatprep.subr.bf16.mxu0 0
    %1215 = vmatpush1.bf16.msra.mxu0 %v755
    %1216 = vmatprep.subr.bf16.mxu0 0
    %1217 = vmatpush1.bf16.msra.mxu0 %v758
    %1218 = vmatprep.subr.bf16.mxu0 0
    %1219 = vmatpush1.bf16.msra.mxu0 %v761
    %1220 = vmatprep.subr.bf16.mxu0 0
    %1221 = vmatpush1.bf16.msra.mxu0 %v764
    %1222 = vmatprep.subr.bf16.mxu0 0
    %1223 = vmatpush1.bf16.msra.mxu0 %v767
    %1224 = vmatprep.subr.bf16.mxu0 0
    %1225 = vmatpush1.bf16.msra.mxu0 %v770
    %1226 = vmatprep.subr.bf16.mxu0 0
    %1227 = vmatpush1.bf16.msra.mxu0 %v773
    %1228 = vmatprep.subr.bf16.mxu0 0
    %1229 = vmatpush1.bf16.msra.mxu0 %v776
    %1230 = vmatprep.subr.bf16.mxu0 0
    %1231 = vmatpush1.bf16.msra.mxu0 %v779
    %1232 = vmatprep.subr.bf16.mxu0 0
    %1233 = vmatpush1.bf16.msra.mxu0 %v782
    %1234 = vmatprep.subr.bf16.mxu0 0
    %1235 = vmatpush1.bf16.msra.mxu0 %v785
    %1236 = vmatprep.subr.bf16.mxu0 0
    %1237 = vmatpush1.bf16.msra.mxu0 %v788
    %1238 = vmatprep.subr.bf16.mxu0 0
    %1239 = vmatpush1.bf16.msra.mxu0 %v791
    %1240 = vmatprep.subr.bf16.mxu0 0
    %1241 = vmatpush1.bf16.msra.mxu0 %v794
    %1242 = vmatprep.subr.bf16.mxu0 0
    %1243 = vmatpush1.bf16.msra.mxu0 %v797
    %1244 = vmatprep.mubr.bf16.mxu0 %v58
    %1245 = vmatmul.mubr.bf16.gmra.mrb[0].mxu0 %v57
    %v1246 = vpop.f32.mrb[0].mxu0
    %v1247 = vadd.f32 0.0, %v1246
    %v1248 = vpop.f32.mrb[0].mxu0
    %v1249 = vpop.f32.mrb[0].mxu0
    %v1250 = vpop.f32.mrb[0].mxu0
    %1251 = vdwg.mxu0
    %1252 = vmatprep.subr.bf16.mxu0 0
    %1253 = vmatpush1.bf16.msra.mxu0 %v800
    %1254 = vmatprep.subr.bf16.mxu0 0
    %1255 = vmatpush1.bf16.msra.mxu0 %v803
    %1256 = vmatprep.subr.bf16.mxu0 0
    %1257 = vmatpush1.bf16.msra.mxu0 %v806
    %1258 = vmatprep.subr.bf16.mxu0 0
    %1259 = vmatpush1.bf16.msra.mxu0 %v809
    %1260 = vmatprep.subr.bf16.mxu0 0
    %1261 = vmatpush1.bf16.msra.mxu0 %v812
    %1262 = vmatprep.subr.bf16.mxu0 0
    %1263 = vmatpush1.bf16.msra.mxu0 %v815
    %1264 = vmatprep.subr.bf16.mxu0 0
    %1265 = vmatpush1.bf16.msra.mxu0 %v818
    %1266 = vmatprep.subr.bf16.mxu0 0
    %1267 = vmatpush1.bf16.msra.mxu0 %v821
    %1268 = vmatprep.subr.bf16.mxu0 0
    %1269 = vmatpush1.bf16.msra.mxu0 %v824
    %1270 = vmatprep.subr.bf16.mxu0 0
    %1271 = vmatpush1.bf16.msra.mxu0 %v827
    %1272 = vmatprep.subr.bf16.mxu0 0
    %1273 = vmatpush1.bf16.msra.mxu0 %v830
    %1274 = vmatprep.subr.bf16.mxu0 0
    %1275 = vmatpush1.bf16.msra.mxu0 %v833
    %1276 = vmatprep.subr.bf16.mxu0 0
    %1277 = vmatpush1.bf16.msra.mxu0 %v836
    %1278 = vmatprep.subr.bf16.mxu0 0
    %1279 = vmatpush1.bf16.msra.mxu0 %v839
    %1280 = vmatprep.subr.bf16.mxu0 0
    %1281 = vmatpush1.bf16.msra.mxu0 %v842
    %1282 = vmatprep.subr.bf16.mxu0 0
    %1283 = vmatpush1.bf16.msra.mxu0 %v845
    %1284 = vmatprep.mubr.bf16.mxu0 %v60
    %1285 = vmatmul.mubr.bf16.gmra.mrb[0].mxu0 %v59
    %v1286 = vpop.f32.mrb[0].mxu0
    %v1287 = vadd.f32 %v1247, %v1286
    %v1288 = vpop.f32.mrb[0].mxu0
    %v1289 = vpop.f32.mrb[0].mxu0
    %v1290 = vpop.f32.mrb[0].mxu0
    %1291 = vdwg.mxu0
    %1292 = vmatprep.subr.bf16.mxu0 0
    %1293 = vmatpush1.bf16.msra.mxu0 %v848
    %1294 = vmatprep.subr.bf16.mxu0 0
    %1295 = vmatpush1.bf16.msra.mxu0 %v851
    %1296 = vmatprep.subr.bf16.mxu0 0
    %1297 = vmatpush1.bf16.msra.mxu0 %v854
    %1298 = vmatprep.subr.bf16.mxu0 0
    %1299 = vmatpush1.bf16.msra.mxu0 %v857
    %1300 = vmatprep.subr.bf16.mxu0 0
    %1301 = vmatpush1.bf16.msra.mxu0 %v860
    %1302 = vmatprep.subr.bf16.mxu0 0
    %1303 = vmatpush1.bf16.msra.mxu0 %v863
    %1304 = vmatprep.subr.bf16.mxu0 0
    %1305 = vmatpush1.bf16.msra.mxu0 %v866
    %1306 = vmatprep.subr.bf16.mxu0 0
    %1307 = vmatpush1.bf16.msra.mxu0 %v869
    %1308 = vmatprep.subr.bf16.mxu0 0
    %1309 = vmatpush1.bf16.msra.mxu0 %v872
    %1310 = vmatprep.subr.bf16.mxu0 0
    %1311 = vmatpush1.bf16.msra.mxu0 %v875
    %1312 = vmatprep.subr.bf16.mxu0 0
    %1313 = vmatpush1.bf16.msra.mxu0 %v878
    %1314 = vmatprep.subr.bf16.mxu0 0
    %1315 = vmatpush1.bf16.msra.mxu0 %v881
    %1316 = vmatprep.subr.bf16.mxu0 0
    %1317 = vmatpush1.bf16.msra.mxu0 %v884
    %1318 = vmatprep.subr.bf16.mxu0 0
    %1319 = vmatpush1.bf16.msra.mxu0 %v887
    %1320 = vmatprep.subr.bf16.mxu0 0
    %1321 = vmatpush1.bf16.msra.mxu0 %v890
    %1322 = vmatprep.subr.bf16.mxu0 0
    %1323 = vmatpush1.bf16.msra.mxu0 %v893
    %1324 = vmatprep.mubr.bf16.mxu0 %v62
    %1325 = vmatmul.mubr.bf16.gmra.mrb[0].mxu0 %v61
    %v1326 = vpop.f32.mrb[0].mxu0
    %v1327 = vadd.f32 %v1287, %v1326
    %v1328 = vpop.f32.mrb[0].mxu0
    %v1329 = vpop.f32.mrb[0].mxu0
    %v1330 = vpop.f32.mrb[0].mxu0
    %1331 = vdwg.mxu0
    %1332 = vmatprep.subr.bf16.mxu0 0
    %1333 = vmatpush1.bf16.msra.mxu0 %v896
    %1334 = vmatprep.subr.bf16.mxu0 0
    %1335 = vmatpush1.bf16.msra.mxu0 0
    %1336 = vmatprep.subr.bf16.mxu0 0
    %1337 = vmatpush1.bf16.msra.mxu0 0
    %1338 = vmatprep.subr.bf16.mxu0 0
    %1339 = vmatpush1.bf16.msra.mxu0 0
    %1340 = vmatprep.subr.bf16.mxu0 0
    %1341 = vmatpush1.bf16.msra.mxu0 0
    %1342 = vmatprep.subr.bf16.mxu0 0
    %1343 = vmatpush1.bf16.msra.mxu0 0
    %1344 = vmatprep.subr.bf16.mxu0 0
    %1345 = vmatpush1.bf16.msra.mxu0 0
    %1346 = vmatprep.subr.bf16.mxu0 0
    %1347 = vmatpush1.bf16.msra.mxu0 0
    %1348 = vmatprep.subr.bf16.mxu0 0
    %1349 = vmatpush1.bf16.msra.mxu0 0
    %1350 = vmatprep.subr.bf16.mxu0 0
    %1351 = vmatpush1.bf16.msra.mxu0 0
    %1352 = vmatprep.subr.bf16.mxu0 0
    %1353 = vmatpush1.bf16.msra.mxu0 0
    %1354 = vmatprep.subr.bf16.mxu0 0
    %1355 = vmatpush1.bf16.msra.mxu0 0
    %1356 = vmatprep.subr.bf16.mxu0 0
    %1357 = vmatpush1.bf16.msra.mxu0 0
    %1358 = vmatprep.subr.bf16.mxu0 0
    %1359 = vmatpush1.bf16.msra.mxu0 0
    %1360 = vmatprep.subr.bf16.mxu0 0
    %1361 = vmatpush1.bf16.msra.mxu0 0
    %1362 = vmatprep.subr.bf16.mxu0 0
    %1363 = vmatpush1.bf16.msra.mxu0 0
    %1364 = vmatprep.mubr.bf16.mxu0 0
    %1365 = vmatmul.mubr.bf16.gmra.mrb[0].mxu0 %v1046
    %v1366 = vpop.f32.mrb[0].mxu0
    %v1367 = vadd.f32 %v1327, %v1366
    %v1368 = vpop.f32.mrb[0].mxu0
    %v1369 = vpop.f32.mrb[0].mxu0
    %v1370 = vpop.f32.mrb[0].mxu0
    %1371 = vdwg.mxu0
    %v1372 = vmax.f32 %v1206, 0.0
    %v1373 = vmax.f32 %v1208, 0.0
    %v1374 = vmax.f32 %v1367, 0.0
    %v1375 = vpack.c.bf16 %v1372, %v1372
    %v1376 = vpack.c.bf16 %v1373, %v1373
    %v1377 = vpack.c.bf16 %v1374, %v1374
    %v1378 = vld [vmem:[%s2] sm:$0xff]
    %v1379 = vld [vmem:[%s2 + $0x8] sm:$0xf]
    %v1380 = vld [vmem:[%s2 + $0xc] sm:$0xff]
    %v1381 = vld [vmem:[%s2 + $0x14] sm:$0xf]
    %v1382 = vld [vmem:[%s2 + $0x18] sm:$0xff]
    %v1383 = vld [vmem:[%s2 + $0x20] sm:$0xf]
    %v1384 = vld [vmem:[%s2 + $0x24] sm:$0xff]
    %v1385 = vld [vmem:[%s2 + $0x2c] sm:$0xf]
    %v1386 = vld [vmem:[%s2 + $0x30] sm:$0xff]
    %v1387 = vld [vmem:[%s2 + $0x38] sm:$0xf]
    %v1388 = vld [vmem:[%s2 + $0x3c] sm:$0xff]
    %v1389 = vld [vmem:[%s2 + $0x44] sm:$0xf]
    %v1390 = vld [vmem:[%s2 + $0x48] sm:$0xff]
    %v1391 = vld [vmem:[%s2 + $0x50] sm:$0xf]
    %v1392 = vld [vmem:[%s2 + $0x54] sm:$0xff]
    %v1393 = vld [vmem:[%s2 + $0x5c] sm:$0xf]
    %v1394 = vld [vmem:[%s2 + $0x60] sm:$0xff]
    %v1395 = vld [vmem:[%s2 + $0x68] sm:$0xf]
    %v1396 = vld [vmem:[%s2 + $0x6c] sm:$0xff]
    %v1397 = vld [vmem:[%s2 + $0x74] sm:$0xf]
    %v1398 = vld [vmem:[%s2 + $0x78] sm:$0xff]
    %v1399 = vld [vmem:[%s2 + $0x80] sm:$0xf]
    %v1400 = vld [vmem:[%s2 + $0x84] sm:$0xff]
    %v1401 = vld [vmem:[%s2 + $0x8c] sm:$0xf]
    %v1402 = vld [vmem:[%s2 + $0x90] sm:$0xff]
    %v1403 = vld [vmem:[%s2 + $0x98] sm:$0xf]
    %v1404 = vld [vmem:[%s2 + $0x9c] sm:$0xff]
    %v1405 = vld [vmem:[%s2 + $0xa4] sm:$0xf]
    %v1406 = vld [vmem:[%s2 + $0xa8] sm:$0xff]
    %v1407 = vld [vmem:[%s2 + $0xb0] sm:$0xf]
    %v1408 = vld [vmem:[%s2 + $0xb4] sm:$0xff]
    %v1409 = vld [vmem:[%s2 + $0xbc] sm:$0xf]
    %v1410 = vld [vmem:[%s2 + $0xc0] sm:$0xff]
    %v1411 = vld [vmem:[%s2 + $0xc8] sm:$0xf]
    %v1412 = vld [vmem:[%s2 + $0xcc] sm:$0xff]
    %v1413 = vld [vmem:[%s2 + $0xd4] sm:$0xf]
    %v1414 = vld [vmem:[%s2 + $0xd8] sm:$0xff]
    %v1415 = vld [vmem:[%s2 + $0xe0] sm:$0xf]
    %v1416 = vld [vmem:[%s2 + $0xe4] sm:$0xff]
    %v1417 = vld [vmem:[%s2 + $0xec] sm:$0xf]
    %v1418 = vld [vmem:[%s2 + $0xf0] sm:$0xff]
    %v1419 = vld [vmem:[%s2 + $0xf8] sm:$0xf]
    %v1420 = vld [vmem:[%s2 + $0xfc] sm:$0xff]
    %v1421 = vld [vmem:[%s2 + $0x104] sm:$0xf]
    %v1422 = vld [vmem:[%s2 + $0x108] sm:$0xff]
    %v1423 = vld [vmem:[%s2 + $0x110] sm:$0xf]
    %v1424 = vld [vmem:[%s2 + $0x114] sm:$0xff]
    %v1425 = vld [vmem:[%s2 + $0x11c] sm:$0xf]
    %v1426 = vld [vmem:[%s2 + $0x120] sm:$0xff]
    %v1427 = vld [vmem:[%s2 + $0x128] sm:$0xf]
    %v1428 = vld [vmem:[%s2 + $0x12c] sm:$0xff]
    %v1429 = vld [vmem:[%s2 + $0x134] sm:$0xf]
    %v1430 = vld [vmem:[%s2 + $0x138] sm:$0xff]
    %v1431 = vld [vmem:[%s2 + $0x140] sm:$0xf]
    %v1432 = vld [vmem:[%s2 + $0x144] sm:$0xff]
    %v1433 = vld [vmem:[%s2 + $0x14c] sm:$0xf]
    %v1434 = vld [vmem:[%s2 + $0x150] sm:$0xff]
    %v1435 = vld [vmem:[%s2 + $0x158] sm:$0xf]
    %v1436 = vld [vmem:[%s2 + $0x15c] sm:$0xff]
    %v1437 = vld [vmem:[%s2 + $0x164] sm:$0xf]
    %v1438 = vld [vmem:[%s2 + $0x168] sm:$0xff]
    %v1439 = vld [vmem:[%s2 + $0x170] sm:$0xf]
    %v1440 = vld [vmem:[%s2 + $0x174] sm:$0xff]
    %v1441 = vld [vmem:[%s2 + $0x17c] sm:$0xf]
    %v1442 = vld [vmem:[%s2 + $0x180] sm:$0xff]
    %v1443 = vld [vmem:[%s2 + $0x188] sm:$0xf]
    %v1444 = vld [vmem:[%s2 + $0x18c] sm:$0xff]
    %v1445 = vld [vmem:[%s2 + $0x194] sm:$0xf]
    %v1446 = vld [vmem:[%s2 + $0x198] sm:$0xff]
    %v1447 = vld [vmem:[%s2 + $0x1a0] sm:$0xf]
    %v1448 = vld [vmem:[%s2 + $0x1a4] sm:$0xff]
    %v1449 = vld [vmem:[%s2 + $0x1ac] sm:$0xf]
    %v1450 = vld [vmem:[%s2 + $0x1b0] sm:$0xff]
    %v1451 = vld [vmem:[%s2 + $0x1b8] sm:$0xf]
    %v1452 = vld [vmem:[%s2 + $0x1bc] sm:$0xff]
    %v1453 = vld [vmem:[%s2 + $0x1c4] sm:$0xf]
    %v1454 = vld [vmem:[%s2 + $0x1c8] sm:$0xff]
    %v1455 = vld [vmem:[%s2 + $0x1d0] sm:$0xf]
    %v1456 = vld [vmem:[%s2 + $0x1d4] sm:$0xff]
    %v1457 = vld [vmem:[%s2 + $0x1dc] sm:$0xf]
    %v1458 = vld [vmem:[%s2 + $0x1e0] sm:$0xff]
    %v1459 = vld [vmem:[%s2 + $0x1e8] sm:$0xf]
    %v1460 = vld [vmem:[%s2 + $0x1ec] sm:$0xff]
    %v1461 = vld [vmem:[%s2 + $0x1f4] sm:$0xf]
    %v1462 = vld [vmem:[%s2 + $0x1f8] sm:$0xff]
    %v1463 = vld [vmem:[%s2 + $0x200] sm:$0xf]
    %v1464 = vld [vmem:[%s2 + $0x204] sm:$0xff]
    %v1465 = vld [vmem:[%s2 + $0x20c] sm:$0xf]
    %v1466 = vld [vmem:[%s2 + $0x210] sm:$0xff]
    %v1467 = vld [vmem:[%s2 + $0x218] sm:$0xf]
    %v1468 = vld [vmem:[%s2 + $0x21c] sm:$0xff]
    %v1469 = vld [vmem:[%s2 + $0x224] sm:$0xf]
    %v1470 = vld [vmem:[%s2 + $0x228] sm:$0xff]
    %v1471 = vld [vmem:[%s2 + $0x230] sm:$0xf]
    %v1472 = vld [vmem:[%s2 + $0x234] sm:$0xff]
    %v1473 = vld [vmem:[%s2 + $0x23c] sm:$0xf]
    %v1570 = vunpack.c.l.b16 %v1378
    %v1571 = vunpack.c.h.b16 %v1378
    %v1572 = vunpack.c.l.b16 %v1379
    %v1573 = vunpack.c.l.b16 %v1380
    %v1574 = vunpack.c.h.b16 %v1380
    %v1575 = vunpack.c.l.b16 %v1381
    %v1576 = vunpack.c.l.b16 %v1382
    %v1577 = vunpack.c.h.b16 %v1382
    %v1578 = vunpack.c.l.b16 %v1383
    %v1579 = vunpack.c.l.b16 %v1384
    %v1580 = vunpack.c.h.b16 %v1384
    %v1581 = vunpack.c.l.b16 %v1385
    %v1582 = vunpack.c.l.b16 %v1386
    %v1583 = vunpack.c.h.b16 %v1386
    %v1584 = vunpack.c.l.b16 %v1387
    %v1585 = vunpack.c.l.b16 %v1388
    %v1586 = vunpack.c.h.b16 %v1388
    %v1587 = vunpack.c.l.b16 %v1389
    %v1588 = vunpack.c.l.b16 %v1390
    %v1589 = vunpack.c.h.b16 %v1390
    %v1590 = vunpack.c.l.b16 %v1391
    %v1591 = vunpack.c.l.b16 %v1392
    %v1592 = vunpack.c.h.b16 %v1392
    %v1593 = vunpack.c.l.b16 %v1393
    %v1594 = vunpack.c.l.b16 %v1394
    %v1595 = vunpack.c.h.b16 %v1394
    %v1596 = vunpack.c.l.b16 %v1395
    %v1597 = vunpack.c.l.b16 %v1396
    %v1598 = vunpack.c.h.b16 %v1396
    %v1599 = vunpack.c.l.b16 %v1397
    %v1600 = vunpack.c.l.b16 %v1398
    %v1601 = vunpack.c.h.b16 %v1398
    %v1602 = vunpack.c.l.b16 %v1399
    %v1603 = vunpack.c.l.b16 %v1400
    %v1604 = vunpack.c.h.b16 %v1400
    %v1605 = vunpack.c.l.b16 %v1401
    %v1606 = vunpack.c.l.b16 %v1402
    %v1607 = vunpack.c.h.b16 %v1402
    %v1608 = vunpack.c.l.b16 %v1403
    %v1609 = vunpack.c.l.b16 %v1404
    %v1610 = vunpack.c.h.b16 %v1404
    %v1611 = vunpack.c.l.b16 %v1405
    %v1612 = vunpack.c.l.b16 %v1406
    %v1613 = vunpack.c.h.b16 %v1406
    %v1614 = vunpack.c.l.b16 %v1407
    %v1615 = vunpack.c.l.b16 %v1408
    %v1616 = vunpack.c.h.b16 %v1408
    %v1617 = vunpack.c.l.b16 %v1409
    %v1618 = vunpack.c.l.b16 %v1410
    %v1619 = vunpack.c.h.b16 %v1410
    %v1620 = vunpack.c.l.b16 %v1411
    %v1621 = vunpack.c.l.b16 %v1412
    %v1622 = vunpack.c.h.b16 %v1412
    %v1623 = vunpack.c.l.b16 %v1413
    %v1624 = vunpack.c.l.b16 %v1414
    %v1625 = vunpack.c.h.b16 %v1414
    %v1626 = vunpack.c.l.b16 %v1415
    %v1627 = vunpack.c.l.b16 %v1416
    %v1628 = vunpack.c.h.b16 %v1416
    %v1629 = vunpack.c.l.b16 %v1417
    %v1630 = vunpack.c.l.b16 %v1418
    %v1631 = vunpack.c.h.b16 %v1418
    %v1632 = vunpack.c.l.b16 %v1419
    %v1633 = vunpack.c.l.b16 %v1420
    %v1634 = vunpack.c.h.b16 %v1420
    %v1635 = vunpack.c.l.b16 %v1421
    %v1636 = vunpack.c.l.b16 %v1422
    %v1637 = vunpack.c.h.b16 %v1422
    %v1638 = vunpack.c.l.b16 %v1423
    %v1639 = vunpack.c.l.b16 %v1424
    %v1640 = vunpack.c.h.b16 %v1424
    %v1641 = vunpack.c.l.b16 %v1425
    %v1642 = vunpack.c.l.b16 %v1426
    %v1643 = vunpack.c.h.b16 %v1426
    %v1644 = vunpack.c.l.b16 %v1427
    %v1645 = vunpack.c.l.b16 %v1428
    %v1646 = vunpack.c.h.b16 %v1428
    %v1647 = vunpack.c.l.b16 %v1429
    %v1648 = vunpack.c.l.b16 %v1430
    %v1649 = vunpack.c.h.b16 %v1430
    %v1650 = vunpack.c.l.b16 %v1431
    %v1651 = vunpack.c.l.b16 %v1432
    %v1652 = vunpack.c.h.b16 %v1432
    %v1653 = vunpack.c.l.b16 %v1433
    %v1654 = vunpack.c.l.b16 %v1434
    %v1655 = vunpack.c.h.b16 %v1434
    %v1656 = vunpack.c.l.b16 %v1435
    %v1657 = vunpack.c.l.b16 %v1436
    %v1658 = vunpack.c.h.b16 %v1436
    %v1659 = vunpack.c.l.b16 %v1437
    %v1660 = vunpack.c.l.b16 %v1438
    %v1661 = vunpack.c.h.b16 %v1438
    %v1662 = vunpack.c.l.b16 %v1439
    %v1663 = vunpack.c.l.b16 %v1440
    %v1664 = vunpack.c.h.b16 %v1440
    %v1665 = vunpack.c.l.b16 %v1441
    %v1666 = vunpack.c.l.b16 %v1442
    %v1667 = vunpack.c.h.b16 %v1442
    %v1668 = vunpack.c.l.b16 %v1443
    %v1669 = vunpack.c.l.b16 %v1444
    %v1670 = vunpack.c.h.b16 %v1444
    %v1671 = vunpack.c.l.b16 %v1445
    %v1672 = vunpack.c.l.b16 %v1446
    %v1673 = vunpack.c.h.b16 %v1446
    %v1674 = vunpack.c.l.b16 %v1447
    %v1675 = vunpack.c.l.b16 %v1448
    %v1676 = vunpack.c.h.b16 %v1448
    %v1677 = vunpack.c.l.b16 %v1449
    %v1678 = vunpack.c.l.b16 %v1450
    %v1679 = vunpack.c.h.b16 %v1450
    %v1680 = vunpack.c.l.b16 %v1451
    %v1681 = vunpack.c.l.b16 %v1452
    %v1682 = vunpack.c.h.b16 %v1452
    %v1683 = vunpack.c.l.b16 %v1453
    %v1684 = vunpack.c.l.b16 %v1454
    %v1685 = vunpack.c.h.b16 %v1454
    %v1686 = vunpack.c.l.b16 %v1455
    %v1687 = vunpack.c.l.b16 %v1456
    %v1688 = vunpack.c.h.b16 %v1456
    %v1689 = vunpack.c.l.b16 %v1457
    %v1690 = vunpack.c.l.b16 %v1458
    %v1691 = vunpack.c.h.b16 %v1458
    %v1692 = vunpack.c.l.b16 %v1459
    %v1693 = vunpack.c.l.b16 %v1460
    %v1694 = vunpack.c.h.b16 %v1460
    %v1695 = vunpack.c.l.b16 %v1461
    %v1696 = vunpack.c.l.b16 %v1462
    %v1697 = vunpack.c.h.b16 %v1462
    %v1698 = vunpack.c.l.b16 %v1463
    %v1699 = vunpack.c.l.b16 %v1464
    %v1700 = vunpack.c.h.b16 %v1464
    %v1701 = vunpack.c.l.b16 %v1465
    %v1702 = vunpack.c.l.b16 %v1466
    %v1703 = vunpack.c.h.b16 %v1466
    %v1704 = vunpack.c.l.b16 %v1467
    %v1705 = vunpack.c.l.b16 %v1468
    %v1706 = vunpack.c.h.b16 %v1468
    %v1707 = vunpack.c.l.b16 %v1469
    %v1708 = vunpack.c.l.b16 %v1470
    %v1709 = vunpack.c.h.b16 %v1470
    %v1710 = vunpack.c.l.b16 %v1471
    %v1711 = vunpack.c.l.b16 %v1472
    %v1712 = vunpack.c.h.b16 %v1472
    %v1713 = vunpack.c.l.b16 %v1473
    %v1714 = vpack.c.b16 %v1573, %v1570
    %v1715 = vpack.c.b16 %v1574, %v1571
    %v1716 = vpack.c.b16 %v1575, %v1572
    %v1717 = vpack.c.b16 %v1579, %v1576
    %v1718 = vpack.c.b16 %v1580, %v1577
    %v1719 = vpack.c.b16 %v1581, %v1578
    %v1720 = vpack.c.b16 %v1585, %v1582
    %v1721 = vpack.c.b16 %v1586, %v1583
    %v1722 = vpack.c.b16 %v1587, %v1584
    %v1723 = vpack.c.b16 %v1591, %v1588
    %v1724 = vpack.c.b16 %v1592, %v1589
    %v1725 = vpack.c.b16 %v1593, %v1590
    %v1726 = vpack.c.b16 %v1597, %v1594
    %v1727 = vpack.c.b16 %v1598, %v1595
    %v1728 = vpack.c.b16 %v1599, %v1596
    %v1729 = vpack.c.b16 %v1603, %v1600
    %v1730 = vpack.c.b16 %v1604, %v1601
    %v1731 = vpack.c.b16 %v1605, %v1602
    %v1732 = vpack.c.b16 %v1609, %v1606
    %v1733 = vpack.c.b16 %v1610, %v1607
    %v1734 = vpack.c.b16 %v1611, %v1608
    %v1735 = vpack.c.b16 %v1615, %v1612
    %v1736 = vpack.c.b16 %v1616, %v1613
    %v1737 = vpack.c.b16 %v1617, %v1614
    %v1738 = vpack.c.b16 %v1621, %v1618
    %v1739 = vpack.c.b16 %v1622, %v1619
    %v1740 = vpack.c.b16 %v1623, %v1620
    %v1741 = vpack.c.b16 %v1627, %v1624
    %v1742 = vpack.c.b16 %v1628, %v1625
    %v1743 = vpack.c.b16 %v1629, %v1626
    %v1744 = vpack.c.b16 %v1633, %v1630
    %v1745 = vpack.c.b16 %v1634, %v1631
    %v1746 = vpack.c.b16 %v1635, %v1632
    %v1747 = vpack.c.b16 %v1639, %v1636
    %v1748 = vpack.c.b16 %v1640, %v1637
    %v1749 = vpack.c.b16 %v1641, %v1638
    %v1750 = vpack.c.b16 %v1645, %v1642
    %v1751 = vpack.c.b16 %v1646, %v1643
    %v1752 = vpack.c.b16 %v1647, %v1644
    %v1753 = vpack.c.b16 %v1651, %v1648
    %v1754 = vpack.c.b16 %v1652, %v1649
    %v1755 = vpack.c.b16 %v1653, %v1650
    %v1756 = vpack.c.b16 %v1657, %v1654
    %v1757 = vpack.c.b16 %v1658, %v1655
    %v1758 = vpack.c.b16 %v1659, %v1656
    %v1759 = vpack.c.b16 %v1663, %v1660
    %v1760 = vpack.c.b16 %v1664, %v1661
    %v1761 = vpack.c.b16 %v1665, %v1662
    %v1762 = vpack.c.b16 %v1669, %v1666
    %v1763 = vpack.c.b16 %v1670, %v1667
    %v1764 = vpack.c.b16 %v1671, %v1668
    %v1765 = vpack.c.b16 %v1675, %v1672
    %v1766 = vpack.c.b16 %v1676, %v1673
    %v1767 = vpack.c.b16 %v1677, %v1674
    %v1768 = vpack.c.b16 %v1681, %v1678
    %v1769 = vpack.c.b16 %v1682, %v1679
    %v1770 = vpack.c.b16 %v1683, %v1680
    %v1771 = vpack.c.b16 %v1687, %v1684
    %v1772 = vpack.c.b16 %v1688, %v1685
    %v1773 = vpack.c.b16 %v1689, %v1686
    %v1774 = vpack.c.b16 %v1693, %v1690
    %v1775 = vpack.c.b16 %v1694, %v1691
    %v1776 = vpack.c.b16 %v1695, %v1692
    %v1777 = vpack.c.b16 %v1699, %v1696
    %v1778 = vpack.c.b16 %v1700, %v1697
    %v1779 = vpack.c.b16 %v1701, %v1698
    %v1780 = vpack.c.b16 %v1705, %v1702
    %v1781 = vpack.c.b16 %v1706, %v1703
    %v1782 = vpack.c.b16 %v1707, %v1704
    %v1783 = vpack.c.b16 %v1711, %v1708
    %v1784 = vpack.c.b16 %v1712, %v1709
    %v1785 = vpack.c.b16 %v1713, %v1710
    %1858 = vmatprep.subr.bf16.mxu0 %v1715
    %1859 = vmatpush1.bf16.msra.mxu0 %v1714
    %1860 = vmatprep.subr.bf16.mxu0 %v1718
    %1861 = vmatpush1.bf16.msra.mxu0 %v1717
    %1862 = vmatprep.subr.bf16.mxu0 %v1721
    %1863 = vmatpush1.bf16.msra.mxu0 %v1720
    %1864 = vmatprep.subr.bf16.mxu0 %v1724
    %1865 = vmatpush1.bf16.msra.mxu0 %v1723
    %1866 = vmatprep.subr.bf16.mxu0 %v1727
    %1867 = vmatpush1.bf16.msra.mxu0 %v1726
    %1868 = vmatprep.subr.bf16.mxu0 %v1730
    %1869 = vmatpush1.bf16.msra.mxu0 %v1729
    %1870 = vmatprep.subr.bf16.mxu0 %v1733
    %1871 = vmatpush1.bf16.msra.mxu0 %v1732
    %1872 = vmatprep.subr.bf16.mxu0 %v1736
    %1873 = vmatpush1.bf16.msra.mxu0 %v1735
    %1874 = vmatprep.subr.bf16.mxu0 %v1739
    %1875 = vmatpush1.bf16.msra.mxu0 %v1738
    %1876 = vmatprep.subr.bf16.mxu0 %v1742
    %1877 = vmatpush1.bf16.msra.mxu0 %v1741
    %1878 = vmatprep.subr.bf16.mxu0 %v1745
    %1879 = vmatpush1.bf16.msra.mxu0 %v1744
    %1880 = vmatprep.subr.bf16.mxu0 %v1748
    %1881 = vmatpush1.bf16.msra.mxu0 %v1747
    %1882 = vmatprep.subr.bf16.mxu0 %v1751
    %1883 = vmatpush1.bf16.msra.mxu0 %v1750
    %1884 = vmatprep.subr.bf16.mxu0 %v1754
    %1885 = vmatpush1.bf16.msra.mxu0 %v1753
    %1886 = vmatprep.subr.bf16.mxu0 %v1757
    %1887 = vmatpush1.bf16.msra.mxu0 %v1756
    %1888 = vmatprep.subr.bf16.mxu0 %v1760
    %1889 = vmatpush1.bf16.msra.mxu0 %v1759
    %1890 = vmatprep.mubr.bf16.mxu0 %v1376
    %1891 = vmatmul.mubr.bf16.gmra.mrb[0].mxu0 %v1375
    %v1892 = vpop.f32.mrb[0].mxu0
    %v1893 = vadd.f32 0.0, %v1892
    %v1894 = vpop.f32.mrb[0].mxu0
    %v1895 = vadd.f32 0.0, %v1894
    %v1896 = vpop.f32.mrb[0].mxu0
    %v1897 = vpop.f32.mrb[0].mxu0
    %1898 = vdwg.mxu0
    %1899 = vmatprep.subr.bf16.mxu0 %v1763
    %1900 = vmatpush1.bf16.msra.mxu0 %v1762
    %1901 = vmatprep.subr.bf16.mxu0 %v1766
    %1902 = vmatpush1.bf16.msra.mxu0 %v1765
    %1903 = vmatprep.subr.bf16.mxu0 %v1769
    %1904 = vmatpush1.bf16.msra.mxu0 %v1768
    %1905 = vmatprep.subr.bf16.mxu0 %v1772
    %1906 = vmatpush1.bf16.msra.mxu0 %v1771
    %1907 = vmatprep.subr.bf16.mxu0 %v1775
    %1908 = vmatpush1.bf16.msra.mxu0 %v1774
    %1909 = vmatprep.subr.bf16.mxu0 %v1778
    %1910 = vmatpush1.bf16.msra.mxu0 %v1777
    %1911 = vmatprep.subr.bf16.mxu0 %v1781
    %1912 = vmatpush1.bf16.msra.mxu0 %v1780
    %1913 = vmatprep.subr.bf16.mxu0 %v1784
    %1914 = vmatpush1.bf16.msra.mxu0 %v1783
    %1915 = vmatprep.subr.bf16.mxu0 0
    %1916 = vmatpush1.bf16.msra.mxu0 0
    %1917 = vmatprep.subr.bf16.mxu0 0
    %1918 = vmatpush1.bf16.msra.mxu0 0
    %1919 = vmatprep.subr.bf16.mxu0 0
    %1920 = vmatpush1.bf16.msra.mxu0 0
    %1921 = vmatprep.subr.bf16.mxu0 0
    %1922 = vmatpush1.bf16.msra.mxu0 0
    %1923 = vmatprep.subr.bf16.mxu0 0
    %1924 = vmatpush1.bf16.msra.mxu0 0
    %1925 = vmatprep.subr.bf16.mxu0 0
    %1926 = vmatpush1.bf16.msra.mxu0 0
    %1927 = vmatprep.subr.bf16.mxu0 0
    %1928 = vmatpush1.bf16.msra.mxu0 0
    %1929 = vmatprep.subr.bf16.mxu0 0
    %1930 = vmatpush1.bf16.msra.mxu0 0
    %1931 = vmatprep.mubr.bf16.mxu0 0
    %1932 = vmatmul.mubr.bf16.gmra.mrb[0].mxu0 %v1377
    %v1933 = vpop.f32.mrb[0].mxu0
    %v1934 = vadd.f32 %v1893, %v1933
    %v1935 = vpop.f32.mrb[0].mxu0
    %v1936 = vadd.f32 %v1895, %v1935
    %v1937 = vpop.f32.mrb[0].mxu0
    %v1938 = vpop.f32.mrb[0].mxu0
    %1939 = vdwg.mxu0
    %1940 = vmatprep.subr.bf16.mxu0 0
    %1941 = vmatpush1.bf16.msra.mxu0 %v1716
    %1942 = vmatprep.subr.bf16.mxu0 0
    %1943 = vmatpush1.bf16.msra.mxu0 %v1719
    %1944 = vmatprep.subr.bf16.mxu0 0
    %1945 = vmatpush1.bf16.msra.mxu0 %v1722
    %1946 = vmatprep.subr.bf16.mxu0 0
    %1947 = vmatpush1.bf16.msra.mxu0 %v1725
    %1948 = vmatprep.subr.bf16.mxu0 0
    %1949 = vmatpush1.bf16.msra.mxu0 %v1728
    %1950 = vmatprep.subr.bf16.mxu0 0
    %1951 = vmatpush1.bf16.msra.mxu0 %v1731
    %1952 = vmatprep.subr.bf16.mxu0 0
    %1953 = vmatpush1.bf16.msra.mxu0 %v1734
    %1954 = vmatprep.subr.bf16.mxu0 0
    %1955 = vmatpush1.bf16.msra.mxu0 %v1737
    %1956 = vmatprep.subr.bf16.mxu0 0
    %1957 = vmatpush1.bf16.msra.mxu0 %v1740
    %1958 = vmatprep.subr.bf16.mxu0 0
    %1959 = vmatpush1.bf16.msra.mxu0 %v1743
    %1960 = vmatprep.subr.bf16.mxu0 0
    %1961 = vmatpush1.bf16.msra.mxu0 %v1746
    %1962 = vmatprep.subr.bf16.mxu0 0
    %1963 = vmatpush1.bf16.msra.mxu0 %v1749
    %1964 = vmatprep.subr.bf16.mxu0 0
    %1965 = vmatpush1.bf16.msra.mxu0 %v1752
    %1966 = vmatprep.subr.bf16.mxu0 0
    %1967 = vmatpush1.bf16.msra.mxu0 %v1755
    %1968 = vmatprep.subr.bf16.mxu0 0
    %1969 = vmatpush1.bf16.msra.mxu0 %v1758
    %1970 = vmatprep.subr.bf16.mxu0 0
    %1971 = vmatpush1.bf16.msra.mxu0 %v1761
    %1972 = vmatprep.mubr.bf16.mxu0 %v1376
    %1973 = vmatmul.mubr.bf16.gmra.mrb[0].mxu0 %v1375
    %v1974 = vpop.f32.mrb[0].mxu0
    %v1975 = vadd.f32 0.0, %v1974
    %v1976 = vpop.f32.mrb[0].mxu0
    %v1977 = vpop.f32.mrb[0].mxu0
    %v1978 = vpop.f32.mrb[0].mxu0
    %1979 = vdwg.mxu0
    %1980 = vmatprep.subr.bf16.mxu0 0
    %1981 = vmatpush1.bf16.msra.mxu0 %v1764
    %1982 = vmatprep.subr.bf16.mxu0 0
    %1983 = vmatpush1.bf16.msra.mxu0 %v1767
    %1984 = vmatprep.subr.bf16.mxu0 0
    %1985 = vmatpush1.bf16.msra.mxu0 %v1770
    %1986 = vmatprep.subr.bf16.mxu0 0
    %1987 = vmatpush1.bf16.msra.mxu0 %v1773
    %1988 = vmatprep.subr.bf16.mxu0 0
    %1989 = vmatpush1.bf16.msra.mxu0 %v1776
    %1990 = vmatprep.subr.bf16.mxu0 0
    %1991 = vmatpush1.bf16.msra.mxu0 %v1779
    %1992 = vmatprep.subr.bf16.mxu0 0
    %1993 = vmatpush1.bf16.msra.mxu0 %v1782
    %1994 = vmatprep.subr.bf16.mxu0 0
    %1995 = vmatpush1.bf16.msra.mxu0 %v1785
    %1996 = vmatprep.subr.bf16.mxu0 0
    %1997 = vmatpush1.bf16.msra.mxu0 0
    %1998 = vmatprep.subr.bf16.mxu0 0
    %1999 = vmatpush1.bf16.msra.mxu0 0
    %2000 = vmatprep.subr.bf16.mxu0 0
    %2001 = vmatpush1.bf16.msra.mxu0 0
    %2002 = vmatprep.subr.bf16.mxu0 0
    %2003 = vmatpush1.bf16.msra.mxu0 0
    %2004 = vmatprep.subr.bf16.mxu0 0
    %2005 = vmatpush1.bf16.msra.mxu0 0
    %2006 = vmatprep.subr.bf16.mxu0 0
    %2007 = vmatpush1.bf16.msra.mxu0 0
    %2008 = vmatprep.subr.bf16.mxu0 0
    %2009 = vmatpush1.bf16.msra.mxu0 0
    %2010 = vmatprep.subr.bf16.mxu0 0
    %2011 = vmatpush1.bf16.msra.mxu0 0
    %2012 = vmatprep.mubr.bf16.mxu0 0
    %2013 = vmatmul.mubr.bf16.gmra.mrb[0].mxu0 %v1377
    %v2014 = vpop.f32.mrb[0].mxu0
    %v2015 = vadd.f32 %v1975, %v2014
    %v2016 = vpop.f32.mrb[0].mxu0
    %v2017 = vpop.f32.mrb[0].mxu0
    %v2018 = vpop.f32.mrb[0].mxu0
    %2019 = vdwg.mxu0
    %v2020 = vmax.f32 %v1934, 0.0
    %v2021 = vmax.f32 %v1936, 0.0
    %v2022 = vmax.f32 %v2015, 0.0
    %v2023 = vpack.c.bf16 %v2020, %v2020
    %v2024 = vpack.c.bf16 %v2021, %v2021
    %v2025 = vpack.c.bf16 %v2022, %v2022
    %v2026 = vld [vmem:[#allocation5] sm:$0xff]
    %v2027 = vld [vmem:[#allocation5 + $0x8] sm:$0xff]
    %v2028 = vld [vmem:[#allocation5 + $0x10] sm:$0xff]
    %v2029 = vld [vmem:[#allocation5 + $0x18] sm:$0xff]
    %v2030 = vld [vmem:[#allocation5 + $0x20] sm:$0xff]
    %v2031 = vld [vmem:[#allocation5 + $0x28] sm:$0xff]
    %v2032 = vld [vmem:[#allocation5 + $0x30] sm:$0xff]
    %v2033 = vld [vmem:[#allocation5 + $0x38] sm:$0xff]
    %v2034 = vld [vmem:[#allocation5 + $0x40] sm:$0xff]
    %v2035 = vld [vmem:[#allocation5 + $0x48] sm:$0xff]
    %v2036 = vld [vmem:[#allocation5 + $0x50] sm:$0xff]
    %v2037 = vld [vmem:[#allocation5 + $0x58] sm:$0xff]
    %v2038 = vld [vmem:[#allocation5 + $0x60] sm:$0xff]
    %v2039 = vld [vmem:[#allocation5 + $0x68] sm:$0xff]
    %v2040 = vld [vmem:[#allocation5 + $0x70] sm:$0xff]
    %v2041 = vld [vmem:[#allocation5 + $0x78] sm:$0xff]
    %v2042 = vld [vmem:[#allocation5 + $0x80] sm:$0xff]
    %v2043 = vld [vmem:[#allocation5 + $0x88] sm:$0xff]
    %v2044 = vld [vmem:[#allocation5 + $0x90] sm:$0xff]
    %v2045 = vld [vmem:[#allocation5 + $0x98] sm:$0xff]
    %v2046 = vld [vmem:[#allocation5 + $0xa0] sm:$0xff]
    %v2047 = vld [vmem:[#allocation5 + $0xa8] sm:$0xff]
    %v2048 = vld [vmem:[#allocation5 + $0xb0] sm:$0xff]
    %v2049 = vld [vmem:[#allocation5 + $0xb8] sm:$0xff]
    %v2050 = vld [vmem:[#allocation5 + $0xc0] sm:$0xff]
    %v2051 = vld [vmem:[#allocation5 + $0xc8] sm:$0xff]
    %v2052 = vld [vmem:[#allocation5 + $0xd0] sm:$0xff]
    %v2053 = vld [vmem:[#allocation5 + $0xd8] sm:$0xff]
    %v2054 = vld [vmem:[#allocation5 + $0xe0] sm:$0xff]
    %v2055 = vld [vmem:[#allocation5 + $0xe8] sm:$0xff]
    %v2056 = vld [vmem:[#allocation5 + $0xf0] sm:$0xff]
    %v2057 = vld [vmem:[#allocation5 + $0xf8] sm:$0xff]
    %v2058 = vld [vmem:[#allocation5 + $0x100] sm:$0xff]
    %v2059 = vld [vmem:[#allocation5 + $0x108] sm:$0xff]
    %v2060 = vld [vmem:[#allocation5 + $0x110] sm:$0xff]
    %v2061 = vld [vmem:[#allocation5 + $0x118] sm:$0xff]
    %v2062 = vld [vmem:[#allocation5 + $0x120] sm:$0xff]
    %v2063 = vld [vmem:[#allocation5 + $0x128] sm:$0xff]
    %v2064 = vld [vmem:[#allocation5 + $0x130] sm:$0xff]
    %v2065 = vld [vmem:[#allocation5 + $0x138] sm:$0xff]
    %v2066 = vld [vmem:[#allocation5 + $0x140] sm:$0xff]
    %v2067 = vld [vmem:[#allocation5 + $0x148] sm:$0xff]
    %v2068 = vld [vmem:[#allocation5 + $0x150] sm:$0xff]
    %v2069 = vld [vmem:[#allocation5 + $0x158] sm:$0xff]
    %v2070 = vld [vmem:[#allocation5 + $0x160] sm:$0xff]
    %v2071 = vld [vmem:[#allocation5 + $0x168] sm:$0xff]
    %v2072 = vld [vmem:[#allocation5 + $0x170] sm:$0xff]
    %v2073 = vld [vmem:[#allocation5 + $0x178] sm:$0xff]
    %v2122 = vunpack.c.l.b16 %v2026
    %v2123 = vunpack.c.h.b16 %v2026
    %v2124 = vunpack.c.l.b16 %v2027
    %v2125 = vunpack.c.h.b16 %v2027
    %v2126 = vunpack.c.l.b16 %v2028
    %v2127 = vunpack.c.h.b16 %v2028
    %v2128 = vunpack.c.l.b16 %v2029
    %v2129 = vunpack.c.h.b16 %v2029
    %v2130 = vunpack.c.l.b16 %v2030
    %v2131 = vunpack.c.h.b16 %v2030
    %v2132 = vunpack.c.l.b16 %v2031
    %v2133 = vunpack.c.h.b16 %v2031
    %v2134 = vunpack.c.l.b16 %v2032
    %v2135 = vunpack.c.h.b16 %v2032
    %v2136 = vunpack.c.l.b16 %v2033
    %v2137 = vunpack.c.h.b16 %v2033
    %v2138 = vunpack.c.l.b16 %v2034
    %v2139 = vunpack.c.h.b16 %v2034
    %v2140 = vunpack.c.l.b16 %v2035
    %v2141 = vunpack.c.h.b16 %v2035
    %v2142 = vunpack.c.l.b16 %v2036
    %v2143 = vunpack.c.h.b16 %v2036
    %v2144 = vunpack.c.l.b16 %v2037
    %v2145 = vunpack.c.h.b16 %v2037
    %v2146 = vunpack.c.l.b16 %v2038
    %v2147 = vunpack.c.h.b16 %v2038
    %v2148 = vunpack.c.l.b16 %v2039
    %v2149 = vunpack.c.h.b16 %v2039
    %v2150 = vunpack.c.l.b16 %v2040
    %v2151 = vunpack.c.h.b16 %v2040
    %v2152 = vunpack.c.l.b16 %v2041
    %v2153 = vunpack.c.h.b16 %v2041
    %v2154 = vunpack.c.l.b16 %v2042
    %v2155 = vunpack.c.h.b16 %v2042
    %v2156 = vunpack.c.l.b16 %v2043
    %v2157 = vunpack.c.h.b16 %v2043
    %v2158 = vunpack.c.l.b16 %v2044
    %v2159 = vunpack.c.h.b16 %v2044
    %v2160 = vunpack.c.l.b16 %v2045
    %v2161 = vunpack.c.h.b16 %v2045
    %v2162 = vunpack.c.l.b16 %v2046
    %v2163 = vunpack.c.h.b16 %v2046
    %v2164 = vunpack.c.l.b16 %v2047
    %v2165 = vunpack.c.h.b16 %v2047
    %v2166 = vunpack.c.l.b16 %v2048
    %v2167 = vunpack.c.h.b16 %v2048
    %v2168 = vunpack.c.l.b16 %v2049
    %v2169 = vunpack.c.h.b16 %v2049
    %v2170 = vunpack.c.l.b16 %v2050
    %v2171 = vunpack.c.h.b16 %v2050
    %v2172 = vunpack.c.l.b16 %v2051
    %v2173 = vunpack.c.h.b16 %v2051
    %v2174 = vunpack.c.l.b16 %v2052
    %v2175 = vunpack.c.h.b16 %v2052
    %v2176 = vunpack.c.l.b16 %v2053
    %v2177 = vunpack.c.h.b16 %v2053
    %v2178 = vunpack.c.l.b16 %v2054
    %v2179 = vunpack.c.h.b16 %v2054
    %v2180 = vunpack.c.l.b16 %v2055
    %v2181 = vunpack.c.h.b16 %v2055
    %v2182 = vunpack.c.l.b16 %v2056
    %v2183 = vunpack.c.h.b16 %v2056
    %v2184 = vunpack.c.l.b16 %v2057
    %v2185 = vunpack.c.h.b16 %v2057
    %v2186 = vunpack.c.l.b16 %v2058
    %v2187 = vunpack.c.h.b16 %v2058
    %v2188 = vunpack.c.l.b16 %v2059
    %v2189 = vunpack.c.h.b16 %v2059
    %v2190 = vunpack.c.l.b16 %v2060
    %v2191 = vunpack.c.h.b16 %v2060
    %v2192 = vunpack.c.l.b16 %v2061
    %v2193 = vunpack.c.h.b16 %v2061
    %v2194 = vunpack.c.l.b16 %v2062
    %v2195 = vunpack.c.h.b16 %v2062
    %v2196 = vunpack.c.l.b16 %v2063
    %v2197 = vunpack.c.h.b16 %v2063
    %v2198 = vunpack.c.l.b16 %v2064
    %v2199 = vunpack.c.h.b16 %v2064
    %v2200 = vunpack.c.l.b16 %v2065
    %v2201 = vunpack.c.h.b16 %v2065
    %v2202 = vunpack.c.l.b16 %v2066
    %v2203 = vunpack.c.h.b16 %v2066
    %v2204 = vunpack.c.l.b16 %v2067
    %v2205 = vunpack.c.h.b16 %v2067
    %v2206 = vunpack.c.l.b16 %v2068
    %v2207 = vunpack.c.h.b16 %v2068
    %v2208 = vunpack.c.l.b16 %v2069
    %v2209 = vunpack.c.h.b16 %v2069
    %v2210 = vunpack.c.l.b16 %v2070
    %v2211 = vunpack.c.h.b16 %v2070
    %v2212 = vunpack.c.l.b16 %v2071
    %v2213 = vunpack.c.h.b16 %v2071
    %v2214 = vunpack.c.l.b16 %v2072
    %v2215 = vunpack.c.h.b16 %v2072
    %v2216 = vunpack.c.l.b16 %v2073
    %v2217 = vunpack.c.h.b16 %v2073
    %v2218 = vpack.c.b16 %v2124, %v2122
    %v2219 = vpack.c.b16 %v2125, %v2123
    %v2220 = vpack.c.b16 %v2128, %v2126
    %v2221 = vpack.c.b16 %v2129, %v2127
    %v2222 = vpack.c.b16 %v2132, %v2130
    %v2223 = vpack.c.b16 %v2133, %v2131
    %v2224 = vpack.c.b16 %v2136, %v2134
    %v2225 = vpack.c.b16 %v2137, %v2135
    %v2226 = vpack.c.b16 %v2140, %v2138
    %v2227 = vpack.c.b16 %v2141, %v2139
    %v2228 = vpack.c.b16 %v2144, %v2142
    %v2229 = vpack.c.b16 %v2145, %v2143
    %v2230 = vpack.c.b16 %v2148, %v2146
    %v2231 = vpack.c.b16 %v2149, %v2147
    %v2232 = vpack.c.b16 %v2152, %v2150
    %v2233 = vpack.c.b16 %v2153, %v2151
    %v2234 = vpack.c.b16 %v2156, %v2154
    %v2235 = vpack.c.b16 %v2157, %v2155
    %v2236 = vpack.c.b16 %v2160, %v2158
    %v2237 = vpack.c.b16 %v2161, %v2159
    %v2238 = vpack.c.b16 %v2164, %v2162
    %v2239 = vpack.c.b16 %v2165, %v2163
    %v2240 = vpack.c.b16 %v2168, %v2166
    %v2241 = vpack.c.b16 %v2169, %v2167
    %v2242 = vpack.c.b16 %v2172, %v2170
    %v2243 = vpack.c.b16 %v2173, %v2171
    %v2244 = vpack.c.b16 %v2176, %v2174
    %v2245 = vpack.c.b16 %v2177, %v2175
    %v2246 = vpack.c.b16 %v2180, %v2178
    %v2247 = vpack.c.b16 %v2181, %v2179
    %v2248 = vpack.c.b16 %v2184, %v2182
    %v2249 = vpack.c.b16 %v2185, %v2183
    %v2250 = vpack.c.b16 %v2188, %v2186
    %v2251 = vpack.c.b16 %v2189, %v2187
    %v2252 = vpack.c.b16 %v2192, %v2190
    %v2253 = vpack.c.b16 %v2193, %v2191
    %v2254 = vpack.c.b16 %v2196, %v2194
    %v2255 = vpack.c.b16 %v2197, %v2195
    %v2256 = vpack.c.b16 %v2200, %v2198
    %v2257 = vpack.c.b16 %v2201, %v2199
    %v2258 = vpack.c.b16 %v2204, %v2202
    %v2259 = vpack.c.b16 %v2205, %v2203
    %v2260 = vpack.c.b16 %v2208, %v2206
    %v2261 = vpack.c.b16 %v2209, %v2207
    %v2262 = vpack.c.b16 %v2212, %v2210
    %v2263 = vpack.c.b16 %v2213, %v2211
    %v2264 = vpack.c.b16 %v2216, %v2214
    %v2265 = vpack.c.b16 %v2217, %v2215
    %2314 = vmatprep.subr.bf16.mxu0 %v2219
    %2315 = vmatpush1.bf16.msra.mxu0 %v2218
    %2316 = vmatprep.subr.bf16.mxu0 %v2221
    %2317 = vmatpush1.bf16.msra.mxu0 %v2220
    %2318 = vmatprep.subr.bf16.mxu0 %v2223
    %2319 = vmatpush1.bf16.msra.mxu0 %v2222
    %2320 = vmatprep.subr.bf16.mxu0 %v2225
    %2321 = vmatpush1.bf16.msra.mxu0 %v2224
    %2322 = vmatprep.subr.bf16.mxu0 %v2227
    %2323 = vmatpush1.bf16.msra.mxu0 %v2226
    %2324 = vmatprep.subr.bf16.mxu0 %v2229
    %2325 = vmatpush1.bf16.msra.mxu0 %v2228
    %2326 = vmatprep.subr.bf16.mxu0 %v2231
    %2327 = vmatpush1.bf16.msra.mxu0 %v2230
    %2328 = vmatprep.subr.bf16.mxu0 %v2233
    %2329 = vmatpush1.bf16.msra.mxu0 %v2232
    %2330 = vmatprep.subr.bf16.mxu0 %v2235
    %2331 = vmatpush1.bf16.msra.mxu0 %v2234
    %2332 = vmatprep.subr.bf16.mxu0 %v2237
    %2333 = vmatpush1.bf16.msra.mxu0 %v2236
    %2334 = vmatprep.subr.bf16.mxu0 %v2239
    %2335 = vmatpush1.bf16.msra.mxu0 %v2238
    %2336 = vmatprep.subr.bf16.mxu0 %v2241
    %2337 = vmatpush1.bf16.msra.mxu0 %v2240
    %2338 = vmatprep.subr.bf16.mxu0 %v2243
    %2339 = vmatpush1.bf16.msra.mxu0 %v2242
    %2340 = vmatprep.subr.bf16.mxu0 %v2245
    %2341 = vmatpush1.bf16.msra.mxu0 %v2244
    %2342 = vmatprep.subr.bf16.mxu0 %v2247
    %2343 = vmatpush1.bf16.msra.mxu0 %v2246
    %2344 = vmatprep.subr.bf16.mxu0 %v2249
    %2345 = vmatpush1.bf16.msra.mxu0 %v2248
    %2346 = vmatprep.mubr.bf16.mxu0 %v2024
    %2347 = vmatmul.mubr.bf16.gmra.mrb[0].mxu0 %v2023
    %v2348 = vpop.f32.mrb[0].mxu0
    %v2349 = vadd.f32 0.0, %v2348
    %v2350 = vpop.f32.mrb[0].mxu0
    %v2351 = vadd.f32 0.0, %v2350
    %v2352 = vpop.f32.mrb[0].mxu0
    %v2353 = vpop.f32.mrb[0].mxu0
    %2354 = vdwg.mxu0
    %2355 = vmatprep.subr.bf16.mxu0 %v2251
    %2356 = vmatpush1.bf16.msra.mxu0 %v2250
    %2357 = vmatprep.subr.bf16.mxu0 %v2253
    %2358 = vmatpush1.bf16.msra.mxu0 %v2252
    %2359 = vmatprep.subr.bf16.mxu0 %v2255
    %2360 = vmatpush1.bf16.msra.mxu0 %v2254
    %2361 = vmatprep.subr.bf16.mxu0 %v2257
    %2362 = vmatpush1.bf16.msra.mxu0 %v2256
    %2363 = vmatprep.subr.bf16.mxu0 %v2259
    %2364 = vmatpush1.bf16.msra.mxu0 %v2258
    %2365 = vmatprep.subr.bf16.mxu0 %v2261
    %2366 = vmatpush1.bf16.msra.mxu0 %v2260
    %2367 = vmatprep.subr.bf16.mxu0 %v2263
    %2368 = vmatpush1.bf16.msra.mxu0 %v2262
    %2369 = vmatprep.subr.bf16.mxu0 %v2265
    %2370 = vmatpush1.bf16.msra.mxu0 %v2264
    %2371 = vmatprep.subr.bf16.mxu0 0
    %2372 = vmatpush1.bf16.msra.mxu0 0
    %2373 = vmatprep.subr.bf16.mxu0 0
    %2374 = vmatpush1.bf16.msra.mxu0 0
    %2375 = vmatprep.subr.bf16.mxu0 0
    %2376 = vmatpush1.bf16.msra.mxu0 0
    %2377 = vmatprep.subr.bf16.mxu0 0
    %2378 = vmatpush1.bf16.msra.mxu0 0
    %2379 = vmatprep.subr.bf16.mxu0 0
    %2380 = vmatpush1.bf16.msra.mxu0 0
    %2381 = vmatprep.subr.bf16.mxu0 0
    %2382 = vmatpush1.bf16.msra.mxu0 0
    %2383 = vmatprep.subr.bf16.mxu0 0
    %2384 = vmatpush1.bf16.msra.mxu0 0
    %2385 = vmatprep.subr.bf16.mxu0 0
    %2386 = vmatpush1.bf16.msra.mxu0 0
    %2387 = vmatprep.mubr.bf16.mxu0 0
    %2388 = vmatmul.mubr.bf16.gmra.mrb[0].mxu0 %v2025
    %v2389 = vpop.f32.mrb[0].mxu0
    %v2390 = vadd.f32 %v2349, %v2389
    %v2391 = vpop.f32.mrb[0].mxu0
    %v2392 = vadd.f32 %v2351, %v2391
    %v2393 = vpop.f32.mrb[0].mxu0
    %v2394 = vpop.f32.mrb[0].mxu0
    %2395 = vdwg.mxu0
    %v2396 = vmax.f32 %v2390, 0.0
    %v2397 = vmax.f32 %v2392, 0.0
    %v2398 = vpack.c.bf16 %v2396, %v2396
    %v2399 = vpack.c.bf16 %v2397, %v2397
    %v2400 = vld [vmem:[%s4] sm:$0xf]
    %v2401 = vld [vmem:[%s4 + $0x4] sm:$0xf]
    %v2402 = vld [vmem:[%s4 + $0x8] sm:$0xf]
    %v2403 = vld [vmem:[%s4 + $0xc] sm:$0xf]
    %v2404 = vld [vmem:[%s4 + $0x10] sm:$0xf]
    %v2405 = vld [vmem:[%s4 + $0x14] sm:$0xf]
    %v2406 = vld [vmem:[%s4 + $0x18] sm:$0xf]
    %v2407 = vld [vmem:[%s4 + $0x1c] sm:$0xf]
    %v2408 = vld [vmem:[%s4 + $0x20] sm:$0xf]
    %v2409 = vld [vmem:[%s4 + $0x24] sm:$0xf]
    %v2410 = vld [vmem:[%s4 + $0x28] sm:$0xf]
    %v2411 = vld [vmem:[%s4 + $0x2c] sm:$0xf]
    %v2412 = vld [vmem:[%s4 + $0x30] sm:$0xf]
    %v2413 = vld [vmem:[%s4 + $0x34] sm:$0xf]
    %v2414 = vld [vmem:[%s4 + $0x38] sm:$0xf]
    %v2415 = vld [vmem:[%s4 + $0x3c] sm:$0xf]
    %v2416 = vld [vmem:[%s4 + $0x40] sm:$0xf]
    %v2417 = vld [vmem:[%s4 + $0x44] sm:$0xf]
    %v2418 = vld [vmem:[%s4 + $0x48] sm:$0xf]
    %v2419 = vld [vmem:[%s4 + $0x4c] sm:$0xf]
    %v2420 = vld [vmem:[%s4 + $0x50] sm:$0xf]
    %v2421 = vld [vmem:[%s4 + $0x54] sm:$0xf]
    %v2422 = vld [vmem:[%s4 + $0x58] sm:$0xf]
    %v2423 = vld [vmem:[%s4 + $0x5c] sm:$0xf]
    %v2424 = vld [vmem:[%s4 + $0x60] sm:$0xf]
    %v2425 = vld [vmem:[%s4 + $0x64] sm:$0xf]
    %v2426 = vld [vmem:[%s4 + $0x68] sm:$0xf]
    %v2427 = vld [vmem:[%s4 + $0x6c] sm:$0xf]
    %v2428 = vld [vmem:[%s4 + $0x70] sm:$0xf]
    %v2429 = vld [vmem:[%s4 + $0x74] sm:$0xf]
    %v2430 = vld [vmem:[%s4 + $0x78] sm:$0xf]
    %v2431 = vld [vmem:[%s4 + $0x7c] sm:$0xf]
    %v2464 = vunpack.c.l.b16 %v2400
    %v2465 = vunpack.c.l.b16 %v2401
    %v2466 = vunpack.c.l.b16 %v2402
    %v2467 = vunpack.c.l.b16 %v2403
    %v2468 = vunpack.c.l.b16 %v2404
    %v2469 = vunpack.c.l.b16 %v2405
    %v2470 = vunpack.c.l.b16 %v2406
    %v2471 = vunpack.c.l.b16 %v2407
    %v2472 = vunpack.c.l.b16 %v2408
    %v2473 = vunpack.c.l.b16 %v2409
    %v2474 = vunpack.c.l.b16 %v2410
    %v2475 = vunpack.c.l.b16 %v2411
    %v2476 = vunpack.c.l.b16 %v2412
    %v2477 = vunpack.c.l.b16 %v2413
    %v2478 = vunpack.c.l.b16 %v2414
    %v2479 = vunpack.c.l.b16 %v2415
    %v2480 = vunpack.c.l.b16 %v2416
    %v2481 = vunpack.c.l.b16 %v2417
    %v2482 = vunpack.c.l.b16 %v2418
    %v2483 = vunpack.c.l.b16 %v2419
    %v2484 = vunpack.c.l.b16 %v2420
    %v2485 = vunpack.c.l.b16 %v2421
    %v2486 = vunpack.c.l.b16 %v2422
    %v2487 = vunpack.c.l.b16 %v2423
    %v2488 = vunpack.c.l.b16 %v2424
    %v2489 = vunpack.c.l.b16 %v2425
    %v2490 = vunpack.c.l.b16 %v2426
    %v2491 = vunpack.c.l.b16 %v2427
    %v2492 = vunpack.c.l.b16 %v2428
    %v2493 = vunpack.c.l.b16 %v2429
    %v2494 = vunpack.c.l.b16 %v2430
    %v2495 = vunpack.c.l.b16 %v2431
    %v2496 = vpack.c.b16 %v2465, %v2464
    %v2497 = vpack.c.b16 %v2467, %v2466
    %v2498 = vpack.c.b16 %v2469, %v2468
    %v2499 = vpack.c.b16 %v2471, %v2470
    %v2500 = vpack.c.b16 %v2473, %v2472
    %v2501 = vpack.c.b16 %v2475, %v2474
    %v2502 = vpack.c.b16 %v2477, %v2476
    %v2503 = vpack.c.b16 %v2479, %v2478
    %v2504 = vpack.c.b16 %v2481, %v2480
    %v2505 = vpack.c.b16 %v2483, %v2482
    %v2506 = vpack.c.b16 %v2485, %v2484
    %v2507 = vpack.c.b16 %v2487, %v2486
    %v2508 = vpack.c.b16 %v2489, %v2488
    %v2509 = vpack.c.b16 %v2491, %v2490
    %v2510 = vpack.c.b16 %v2493, %v2492
    %v2511 = vpack.c.b16 %v2495, %v2494
    %2528 = vmatprep.subr.bf16.mxu0 0
    %2529 = vmatpush1.bf16.msra.mxu0 %v2496
    %2530 = vmatprep.subr.bf16.mxu0 0
    %2531 = vmatpush1.bf16.msra.mxu0 %v2497
    %2532 = vmatprep.subr.bf16.mxu0 0
    %2533 = vmatpush1.bf16.msra.mxu0 %v2498
    %2534 = vmatprep.subr.bf16.mxu0 0
    %2535 = vmatpush1.bf16.msra.mxu0 %v2499
    %2536 = vmatprep.subr.bf16.mxu0 0
    %2537 = vmatpush1.bf16.msra.mxu0 %v2500
    %2538 = vmatprep.subr.bf16.mxu0 0
    %2539 = vmatpush1.bf16.msra.mxu0 %v2501
    %2540 = vmatprep.subr.bf16.mxu0 0
    %2541 = vmatpush1.bf16.msra.mxu0 %v2502
    %2542 = vmatprep.subr.bf16.mxu0 0
    %2543 = vmatpush1.bf16.msra.mxu0 %v2503
    %2544 = vmatprep.subr.bf16.mxu0 0
    %2545 = vmatpush1.bf16.msra.mxu0 %v2504
    %2546 = vmatprep.subr.bf16.mxu0 0
    %2547 = vmatpush1.bf16.msra.mxu0 %v2505
    %2548 = vmatprep.subr.bf16.mxu0 0
    %2549 = vmatpush1.bf16.msra.mxu0 %v2506
    %2550 = vmatprep.subr.bf16.mxu0 0
    %2551 = vmatpush1.bf16.msra.mxu0 %v2507
    %2552 = vmatprep.subr.bf16.mxu0 0
    %2553 = vmatpush1.bf16.msra.mxu0 %v2508
    %2554 = vmatprep.subr.bf16.mxu0 0
    %2555 = vmatpush1.bf16.msra.mxu0 %v2509
    %2556 = vmatprep.subr.bf16.mxu0 0
    %2557 = vmatpush1.bf16.msra.mxu0 %v2510
    %2558 = vmatprep.subr.bf16.mxu0 0
    %2559 = vmatpush1.bf16.msra.mxu0 %v2511
    %2560 = vmatprep.mubr.bf16.mxu0 %v2399
    %2561 = vmatmul.mubr.bf16.gmra.mrb[0].mxu0 %v2398
    %v2562 = vpop.f32.mrb[0].mxu0
    %v2563 = vadd.f32 0.0, %v2562
    %v2564 = vpop.f32.mrb[0].mxu0
    %v2565 = vpop.f32.mrb[0].mxu0
    %v2566 = vpop.f32.mrb[0].mxu0
    %2567 = vdwg.mxu0
    %2568 = vst [vmem:[#allocation7] sm:$0xff] %v2563
    // Predicated region
    $region30: #{simple_net_forward.1} parent=1 // pred_check
      _
    $region31: #{simple_net_forward.1} parent=1 // pred_check_branch
      %2570 = sbr.rel (0) target = $region33
    $region32: #{simple_net_forward.1} parent=1 // pred_region
      %s2572 = ssub.s32 128, 128
      %2573 = vsyncadd [#allocation4], %s2572
      %s2575 = sshll.u32 [#allocation7], 4
      %s2576 = int_to_ptr.vmem [resolvable:$true] %s2575
      %2578 = dma.vmem_to_hbm [thread:$0]  %s2576, 128, %s5, [#allocation4]
    $region33: #{simple_net_forward.1} parent=1 // pred_fallthru
      _
    // Predicated region
    $region34: #{simple_net_forward.1} parent=1 // pred_check
      _
    $region35: #{simple_net_forward.1} parent=1 // pred_check_branch
      %2580 = sbr.rel (0) target = $region37
    $region36: #{simple_net_forward.1} parent=1 // pred_region
      %2581 = dma.done [#allocation4], 128
    $region37: #{simple_net_forward.1} parent=1 // pred_fallthru
      _
    %2582 = vsyncpa [#allocation3], 1
    %2583 = vsyncpa [#allocation6], 1
    %2584 = vsyncpa [#allocation4], 1

</llo_original>
